<compile_context>
chip_gen: v7x
topology: tpu7x:2x2x1
jax: 0.10.0
libtpu: 0.0.40
codegen_flags: <defaults>
</compile_context>

<pallas_src>
import functools

import jax
import jax.numpy as jnp
from jax.experimental import pallas as pl
from jax.experimental.pallas import tpu as pltpu


# ----------------------------- Pallas kernel -----------------------------

def _duc_conv_bn_relu_kernel(x_ref, w_ref, b_ref, o_ref, *, H):
    """Fused 3x3 conv (implicit GEMM, 3 row-tap matmuls) + bias + ReLU.

    x_ref: (1, H+2, (W+2)*Cin)    bf16  padded input, rows flattened over (W,C)
    w_ref: (3, (W+2)*Cin, W*Cout) bf16  banded conv weights (BN scale folded)
    b_ref: (1, W*Cout)            f32   BN bias, tiled across W
    o_ref: (1, H, W*Cout)         f32   lane-dense output rows
    """
    acc = jnp.dot(x_ref[0, 0:H, :], w_ref[0],
                  preferred_element_type=jnp.float32)
    acc += jnp.dot(x_ref[0, 1:H + 1, :], w_ref[1],
                   preferred_element_type=jnp.float32)
    acc += jnp.dot(x_ref[0, 2:H + 2, :], w_ref[2],
                   preferred_element_type=jnp.float32)
    o_ref[0] = jnp.maximum(acc + b_ref[...], 0.0)


def duc_conv_bn_relu(xrow, w_band, bias_row, *, H, W, Cout):
    """xrow: (B, H+2, (W+2)*Cin) bf16 -> (B, H, W*Cout) f32."""
    B = xrow.shape[0]
    KB = xrow.shape[2]
    NB = W * Cout
    kernel = functools.partial(_duc_conv_bn_relu_kernel, H=H)
    return pl.pallas_call(
        kernel,
        out_shape=jax.ShapeDtypeStruct((B, H, NB), jnp.float32),
        grid_spec=pltpu.PrefetchScalarGridSpec(
            num_scalar_prefetch=0,
            grid=(B,),
            in_specs=[
                pl.BlockSpec((1, H + 2, KB), lambda b: (b, 0, 0)),
                pl.BlockSpec((3, KB, NB), lambda b: (0, 0, 0)),
                pl.BlockSpec((1, NB), lambda b: (0, 0)),
            ],
            out_specs=pl.BlockSpec((1, H, NB), lambda b: (b, 0, 0)),
        ),
        compiler_params=pltpu.CompilerParams(
            dimension_semantics=("parallel",)),
    )(xrow, w_band, bias_row)


# ------------------------------ JAX glue ---------------------------------

def _pixel_shuffle_nhwc(y_nhwc, r):
    """NHWC pixel shuffle matching torch.nn.PixelShuffle (NCHW channel order)."""
    B, H, W, CR2 = y_nhwc.shape
    C = CR2 // (r * r)
    y = y_nhwc.reshape(B, H, W, C, r, r)
    y = jnp.transpose(y, (0, 1, 4, 2, 5, 3))  # B, H, r, W, r, C
    return y.reshape(B, H * r, W * r, C)


def duc_stage(x_nhwc, w_band, bias_row, r):
    """One DUC stage: conv3x3 -> BN(eval) -> ReLU -> PixelShuffle(r)."""
    B, H, W, Cin = x_nhwc.shape
    Cout = w_band.shape[2] // W
    xp = jnp.pad(x_nhwc, ((0, 0), (1, 1), (1, 1), (0, 0)))
    xrow = xp.reshape(B, H + 2, (W + 2) * Cin).astype(jnp.bfloat16)
    y = duc_conv_bn_relu(xrow, w_band, bias_row, H=H, W=W, Cout=Cout)
    y = y.reshape(B, H, W, Cout)
    return _pixel_shuffle_nhwc(y, r)


def duc_nx_forward(x_nchw, stage_params, r):
    """DUCnx forward.  x_nchw: (B, Cin, H, W) -> (B, C_last/r^2, H*r^n, W*r^n)."""
    x = jnp.transpose(x_nchw, (0, 2, 3, 1))  # NCHW -> NHWC
    for w_band, bias_row in stage_params:
        x = duc_stage(x, w_band, bias_row, r)
    return jnp.transpose(x, (0, 3, 1, 2))    # NHWC -> NCHW


# -------------------------- Parameter construction -----------------------

def make_stage_params(key, in_channel, out_channel, eps=1e-5):
    """Deterministic conv weight (PyTorch OIHW) + BN scale/bias (eval mode)."""
    w_oihw = 0.1 * jax.random.normal(key, (out_channel, in_channel, 3, 3),
                                     dtype=jnp.float32)
    gamma = 1.0 + 0.1 * jnp.arange(out_channel, dtype=jnp.float32) / out_channel
    beta = 0.05 * jnp.arange(out_channel, dtype=jnp.float32)
    running_mean = 0.01 * jnp.arange(out_channel, dtype=jnp.float32)
    running_var = jnp.ones((out_channel,), dtype=jnp.float32)
    scale = gamma / jnp.sqrt(running_var + eps)
    bias = beta - running_mean * scale
    return w_oihw, scale, bias


def fold_band_weights(w_oihw, scale, W):
    """OIHW 3x3 conv weight + BN scale -> banded (3, (W+2)*Cin, W*Cout) bf16.

    band[dy, j*Cin + c, w*Cout + o] = w[o, c, dy, j - w] * scale[o]
    for 0 <= j - w <= 2, else 0.  Encodes the dx sliding window so the conv
    over width becomes one dense matmul per row tap dy.
    """
    Cout, Cin, _, _ = w_oihw.shape
    wt = jnp.transpose(w_oihw * scale.reshape(-1, 1, 1, 1),
                       (2, 3, 1, 0))                      # (3, 3, Cin, Cout)
    j = jnp.arange(W + 2)
    w = jnp.arange(W)
    dx = j[:, None] - w[None, :]                          # (W+2, W)
    valid = (dx >= 0) & (dx <= 2)
    taps = wt[:, jnp.clip(dx, 0, 2)]                      # (3, W+2, W, Cin, Cout)
    taps = jnp.transpose(taps, (0, 1, 3, 2, 4))           # (3, W+2, Cin, W, Cout)
    band = jnp.where(valid[None, :, None, :, None], taps, 0.0)
    return band.reshape(3, (W + 2) * Cin, W * Cout).astype(jnp.bfloat16)


# ------------------------------ Reference --------------------------------

def _reference_forward(x_nchw, raw_params, r):
    """Pure-JAX f32 reference (lax conv) for numerical verification."""
    x = x_nchw
    for w_oihw, scale, bias in raw_params:
        y = jax.lax.conv_general_dilated(
            x, w_oihw, window_strides=(1, 1), padding=((1, 1), (1, 1)),
            dimension_numbers=("NCHW", "OIHW", "NCHW"))
        y = y * scale.reshape(1, -1, 1, 1) + bias.reshape(1, -1, 1, 1)
        y = jnp.maximum(y, 0.0)
        B, CR2, Hc, Wc = y.shape
        C = CR2 // (r * r)
        y = y.reshape(B, C, r, r, Hc, Wc)
        y = jnp.transpose(y, (0, 1, 4, 2, 5, 3)).reshape(B, C, Hc * r, Wc * r)
        x = y
    return x


# --------------------------------- Main ----------------------------------

if __name__ == "__main__":
    key = jax.random.PRNGKey(0)

    B, Cin, H, W = 2, 4, 16, 16
    stages = (16, 8)
    upscale_factor = 2

    k_x, *k_stages = jax.random.split(key, 1 + len(stages))
    x = jax.random.normal(k_x, (B, Cin, H, W), dtype=jnp.float32)

    raw_params, kernel_params = [], []
    in_ch, cur_w = Cin, W
    for kst, out_ch in zip(k_stages, stages):
        w_oihw, scale, bias = make_stage_params(kst, in_ch, out_ch)
        raw_params.append((w_oihw, scale, bias))
        kernel_params.append((
            fold_band_weights(w_oihw, scale, cur_w),
            jnp.tile(bias.reshape(1, -1), (1, cur_w)),     # (1, W*Cout)
        ))
        in_ch = out_ch // upscale_factor ** 2
        cur_w *= upscale_factor

    fwd = jax.jit(functools.partial(duc_nx_forward, r=upscale_factor))
    out = jax.block_until_ready(fwd(x, kernel_params))

    ref = _reference_forward(x, raw_params, upscale_factor)
    n_st = len(stages)
    expected_shape = (B, stages[-1] // upscale_factor ** 2,
                      H * upscale_factor ** n_st, W * upscale_factor ** n_st)
    assert out.shape == ref.shape == expected_shape, (out.shape, ref.shape)
    max_err = float(jnp.max(jnp.abs(out - ref)))
    # bf16 inputs/weights (f32 accumulation) -> loosened tolerance vs f32 ref.
    assert jnp.allclose(out, ref, rtol=5e-2, atol=5e-2), max_err

    print("KERNEL_OK")
</pallas_src>

<mosaic_0001>
module attributes {stable_mosaic.version = 11 : i64} {
  func.func @_duc_conv_bn_relu_kernel(%arg0: i32, %arg1: memref<1x18x72xbf16, #tpu.memory_space<vmem>>, %arg2: memref<3x72x256xbf16, #tpu.memory_space<vmem>>, %arg3: memref<1x256xf32, #tpu.memory_space<vmem>>, %arg4: memref<1x16x256xf32, #tpu.memory_space<vmem>>) attributes {dimension_semantics = [#tpu.dimension_semantics<parallel>], iteration_bounds = array<i64: 2>, scalar_prefetch = 0 : i64, scratch_operands = 0 : i64, tpu.core_type = #tpu.core_type<tc>, window_params = [{transform_indices = @transform_0, window_bounds = array<i64: 1, 18, 72>}, {pipeline_mode = #tpu.pipeline_mode<synchronous>, transform_indices = @transform_1, window_bounds = array<i64: 3, 72, 256>}, {pipeline_mode = #tpu.pipeline_mode<synchronous>, transform_indices = @transform_2, window_bounds = array<i64: 1, 256>}, {transform_indices = @transform_3, window_bounds = array<i64: 1, 16, 256>}]} {
    %c0 = arith.constant 0 : index
    %c0_0 = arith.constant 0 : index
    %c0_1 = arith.constant 0 : index
    %0 = vector.load %arg1[%c0, %c0_0, %c0_1] : memref<1x18x72xbf16, #tpu.memory_space<vmem>>, vector<1x16x72xbf16>
    %1 = vector.shape_cast %0 : vector<1x16x72xbf16> to vector<16x72xbf16>
    %c0_2 = arith.constant 0 : index
    %c0_3 = arith.constant 0 : index
    %c0_4 = arith.constant 0 : index
    %2 = vector.load %arg2[%c0_2, %c0_3, %c0_4] : memref<3x72x256xbf16, #tpu.memory_space<vmem>>, vector<1x72x256xbf16>
    %3 = vector.shape_cast %2 : vector<1x72x256xbf16> to vector<72x256xbf16>
    %cst = arith.constant dense<0.000000e+00> : vector<16x256xf32>
    %4 = tpu.matmul %1, %3, %cst {dimension_numbers = #tpu.dot_dimension_numbers<[1], [0], [0], [1], [0, 0, 1, 1], [], []>} : vector<16x72xbf16>, vector<72x256xbf16>, vector<16x256xf32> -> vector<16x256xf32>
    %c0_5 = arith.constant 0 : index
    %c1 = arith.constant 1 : index
    %c0_6 = arith.constant 0 : index
    %5 = vector.load %arg1[%c0_5, %c1, %c0_6] : memref<1x18x72xbf16, #tpu.memory_space<vmem>>, vector<1x16x72xbf16>
    %6 = vector.shape_cast %5 : vector<1x16x72xbf16> to vector<16x72xbf16>
    %c1_7 = arith.constant 1 : index
    %c0_8 = arith.constant 0 : index
    %c0_9 = arith.constant 0 : index
    %7 = vector.load %arg2[%c1_7, %c0_8, %c0_9] : memref<3x72x256xbf16, #tpu.memory_space<vmem>>, vector<1x72x256xbf16>
    %8 = vector.shape_cast %7 : vector<1x72x256xbf16> to vector<72x256xbf16>
    %cst_10 = arith.constant dense<0.000000e+00> : vector<16x256xf32>
    %9 = tpu.matmul %6, %8, %cst_10 {dimension_numbers = #tpu.dot_dimension_numbers<[1], [0], [0], [1], [0, 0, 1, 1], [], []>} : vector<16x72xbf16>, vector<72x256xbf16>, vector<16x256xf32> -> vector<16x256xf32>
    %10 = arith.addf %4, %9 : vector<16x256xf32>
    %c0_11 = arith.constant 0 : index
    %c2 = arith.constant 2 : index
    %c0_12 = arith.constant 0 : index
    %11 = vector.load %arg1[%c0_11, %c2, %c0_12] : memref<1x18x72xbf16, #tpu.memory_space<vmem>>, vector<1x16x72xbf16>
    %12 = vector.shape_cast %11 : vector<1x16x72xbf16> to vector<16x72xbf16>
    %c2_13 = arith.constant 2 : index
    %c0_14 = arith.constant 0 : index
    %c0_15 = arith.constant 0 : index
    %13 = vector.load %arg2[%c2_13, %c0_14, %c0_15] : memref<3x72x256xbf16, #tpu.memory_space<vmem>>, vector<1x72x256xbf16>
    %14 = vector.shape_cast %13 : vector<1x72x256xbf16> to vector<72x256xbf16>
    %cst_16 = arith.constant dense<0.000000e+00> : vector<16x256xf32>
    %15 = tpu.matmul %12, %14, %cst_16 {dimension_numbers = #tpu.dot_dimension_numbers<[1], [0], [0], [1], [0, 0, 1, 1], [], []>} : vector<16x72xbf16>, vector<72x256xbf16>, vector<16x256xf32> -> vector<16x256xf32>
    %16 = arith.addf %10, %15 : vector<16x256xf32>
    %c0_17 = arith.constant 0 : index
    %c0_18 = arith.constant 0 : index
    %17 = vector.load %arg3[%c0_17, %c0_18] : memref<1x256xf32, #tpu.memory_space<vmem>>, vector<1x256xf32>
    %18 = vector.broadcast %17 : vector<1x256xf32> to vector<16x256xf32>
    %19 = arith.addf %16, %18 : vector<16x256xf32>
    %cst_19 = arith.constant 0.000000e+00 : f32
    %20 = vector.broadcast %cst_19 : f32 to vector<16x256xf32>
    %21 = arith.maximumf %19, %20 : vector<16x256xf32>
    %c0_20 = arith.constant 0 : index
    %c0_21 = arith.constant 0 : index
    %c0_22 = arith.constant 0 : index
    %22 = vector.load %arg4[%c0_20, %c0_21, %c0_22] : memref<1x16x256xf32, #tpu.memory_space<vmem>>, vector<1x16x256xf32>
    %23 = vector.shape_cast %22 : vector<1x16x256xf32> to vector<16x256xf32>
    %24 = vector.shape_cast %21 : vector<16x256xf32> to vector<1x16x256xf32>
    tpu.vector_store %arg4[%c0_20, %c0_21, %c0_22], %24 {strides = array<i32>} : memref<1x16x256xf32, #tpu.memory_space<vmem>>, vector<1x16x256xf32>,
    return
  }
  func.func @transform_0(%arg0: i32) -> (i32, i32, i32) {
    %c0_i32 = arith.constant 0 : i32
    %c0_i32_0 = arith.constant 0 : i32
    %c0_i32_1 = arith.constant 0 : i32
    return %arg0, %c0_i32, %c0_i32_0 : i32, i32, i32
  }
  func.func @transform_1(%arg0: i32) -> (i32, i32, i32) {
    %c0_i32 = arith.constant 0 : i32
    %c0_i32_0 = arith.constant 0 : i32
    %c0_i32_1 = arith.constant 0 : i32
    %c0_i32_2 = arith.constant 0 : i32
    return %c0_i32, %c0_i32_0, %c0_i32_1 : i32, i32, i32
  }
  func.func @transform_2(%arg0: i32) -> (i32, i32) {
    %c0_i32 = arith.constant 0 : i32
    %c0_i32_0 = arith.constant 0 : i32
    %c0_i32_1 = arith.constant 0 : i32
    return %c0_i32, %c0_i32_0 : i32, i32
  }
  func.func @transform_3(%arg0: i32) -> (i32, i32, i32) {
    %c0_i32 = arith.constant 0 : i32
    %c0_i32_0 = arith.constant 0 : i32
    %c0_i32_1 = arith.constant 0 : i32
    return %arg0, %c0_i32, %c0_i32_0 : i32, i32, i32
  }
}

module attributes {stable_mosaic.version = 11 : i64} {
  func.func @_duc_conv_bn_relu_kernel(%arg0: i32, %arg1: memref<1x34x136xbf16, #tpu.memory_space<vmem>>, %arg2: memref<3x136x256xbf16, #tpu.memory_space<vmem>>, %arg3: memref<1x256xf32, #tpu.memory_space<vmem>>, %arg4: memref<1x32x256xf32, #tpu.memory_space<vmem>>) attributes {dimension_semantics = [#tpu.dimension_semantics<parallel>], iteration_bounds = array<i64: 2>, scalar_prefetch = 0 : i64, scratch_operands = 0 : i64, tpu.core_type = #tpu.core_type<tc>, window_params = [{transform_indices = @transform_0, window_bounds = array<i64: 1, 34, 136>}, {pipeline_mode = #tpu.pipeline_mode<synchronous>, transform_indices = @transform_1, window_bounds = array<i64: 3, 136, 256>}, {pipeline_mode = #tpu.pipeline_mode<synchronous>, transform_indices = @transform_2, window_bounds = array<i64: 1, 256>}, {transform_indices = @transform_3, window_bounds = array<i64: 1, 32, 256>}]} {
    %c0 = arith.constant 0 : index
    %c0_0 = arith.constant 0 : index
    %c0_1 = arith.constant 0 : index
    %0 = vector.load %arg1[%c0, %c0_0, %c0_1] : memref<1x34x136xbf16, #tpu.memory_space<vmem>>, vector<1x32x136xbf16>
    %1 = vector.shape_cast %0 : vector<1x32x136xbf16> to vector<32x136xbf16>
    %c0_2 = arith.constant 0 : index
    %c0_3 = arith.constant 0 : index
    %c0_4 = arith.constant 0 : index
    %2 = vector.load %arg2[%c0_2, %c0_3, %c0_4] : memref<3x136x256xbf16, #tpu.memory_space<vmem>>, vector<1x136x256xbf16>
    %3 = vector.shape_cast %2 : vector<1x136x256xbf16> to vector<136x256xbf16>
    %cst = arith.constant dense<0.000000e+00> : vector<32x256xf32>
    %4 = tpu.matmul %1, %3, %cst {dimension_numbers = #tpu.dot_dimension_numbers<[1], [0], [0], [1], [0, 0, 1, 1], [], []>} : vector<32x136xbf16>, vector<136x256xbf16>, vector<32x256xf32> -> vector<32x256xf32>
    %c0_5 = arith.constant 0 : index
    %c1 = arith.constant 1 : index
    %c0_6 = arith.constant 0 : index
    %5 = vector.load %arg1[%c0_5, %c1, %c0_6] : memref<1x34x136xbf16, #tpu.memory_space<vmem>>, vector<1x32x136xbf16>
    %6 = vector.shape_cast %5 : vector<1x32x136xbf16> to vector<32x136xbf16>
    %c1_7 = arith.constant 1 : index
    %c0_8 = arith.constant 0 : index
    %c0_9 = arith.constant 0 : index
    %7 = vector.load %arg2[%c1_7, %c0_8, %c0_9] : memref<3x136x256xbf16, #tpu.memory_space<vmem>>, vector<1x136x256xbf16>
    %8 = vector.shape_cast %7 : vector<1x136x256xbf16> to vector<136x256xbf16>
    %cst_10 = arith.constant dense<0.000000e+00> : vector<32x256xf32>
    %9 = tpu.matmul %6, %8, %cst_10 {dimension_numbers = #tpu.dot_dimension_numbers<[1], [0], [0], [1], [0, 0, 1, 1], [], []>} : vector<32x136xbf16>, vector<136x256xbf16>, vector<32x256xf32> -> vector<32x256xf32>
    %10 = arith.addf %4, %9 : vector<32x256xf32>
    %c0_11 = arith.constant 0 : index
    %c2 = arith.constant 2 : index
    %c0_12 = arith.constant 0 : index
    %11 = vector.load %arg1[%c0_11, %c2, %c0_12] : memref<1x34x136xbf16, #tpu.memory_space<vmem>>, vector<1x32x136xbf16>
    %12 = vector.shape_cast %11 : vector<1x32x136xbf16> to vector<32x136xbf16>
    %c2_13 = arith.constant 2 : index
    %c0_14 = arith.constant 0 : index
    %c0_15 = arith.constant 0 : index
    %13 = vector.load %arg2[%c2_13, %c0_14, %c0_15] : memref<3x136x256xbf16, #tpu.memory_space<vmem>>, vector<1x136x256xbf16>
    %14 = vector.shape_cast %13 : vector<1x136x256xbf16> to vector<136x256xbf16>
    %cst_16 = arith.constant dense<0.000000e+00> : vector<32x256xf32>
    %15 = tpu.matmul %12, %14, %cst_16 {dimension_numbers = #tpu.dot_dimension_numbers<[1], [0], [0], [1], [0, 0, 1, 1], [], []>} : vector<32x136xbf16>, vector<136x256xbf16>, vector<32x256xf32> -> vector<32x256xf32>
    %16 = arith.addf %10, %15 : vector<32x256xf32>
    %c0_17 = arith.constant 0 : index
    %c0_18 = arith.constant 0 : index
    %17 = vector.load %arg3[%c0_17, %c0_18] : memref<1x256xf32, #tpu.memory_space<vmem>>, vector<1x256xf32>
    %18 = vector.broadcast %17 : vector<1x256xf32> to vector<32x256xf32>
    %19 = arith.addf %16, %18 : vector<32x256xf32>
    %cst_19 = arith.constant 0.000000e+00 : f32
    %20 = vector.broadcast %cst_19 : f32 to vector<32x256xf32>
    %21 = arith.maximumf %19, %20 : vector<32x256xf32>
    %c0_20 = arith.constant 0 : index
    %c0_21 = arith.constant 0 : index
    %c0_22 = arith.constant 0 : index
    %22 = vector.load %arg4[%c0_20, %c0_21, %c0_22] : memref<1x32x256xf32, #tpu.memory_space<vmem>>, vector<1x32x256xf32>
    %23 = vector.shape_cast %22 : vector<1x32x256xf32> to vector<32x256xf32>
    %24 = vector.shape_cast %21 : vector<32x256xf32> to vector<1x32x256xf32>
    tpu.vector_store %arg4[%c0_20, %c0_21, %c0_22], %24 {strides = array<i32>} : memref<1x32x256xf32, #tpu.memory_space<vmem>>, vector<1x32x256xf32>,
    return
  }
  func.func @transform_0(%arg0: i32) -> (i32, i32, i32) {
    %c0_i32 = arith.constant 0 : i32
    %c0_i32_0 = arith.constant 0 : i32
    %c0_i32_1 = arith.constant 0 : i32
    return %arg0, %c0_i32, %c0_i32_0 : i32, i32, i32
  }
  func.func @transform_1(%arg0: i32) -> (i32, i32, i32) {
    %c0_i32 = arith.constant 0 : i32
    %c0_i32_0 = arith.constant 0 : i32
    %c0_i32_1 = arith.constant 0 : i32
    %c0_i32_2 = arith.constant 0 : i32
    return %c0_i32, %c0_i32_0, %c0_i32_1 : i32, i32, i32
  }
  func.func @transform_2(%arg0: i32) -> (i32, i32) {
    %c0_i32 = arith.constant 0 : i32
    %c0_i32_0 = arith.constant 0 : i32
    %c0_i32_1 = arith.constant 0 : i32
    return %c0_i32, %c0_i32_0 : i32, i32
  }
  func.func @transform_3(%arg0: i32) -> (i32, i32, i32) {
    %c0_i32 = arith.constant 0 : i32
    %c0_i32_0 = arith.constant 0 : i32
    %c0_i32_1 = arith.constant 0 : i32
    return %arg0, %c0_i32, %c0_i32_0 : i32, i32, i32
  }
}

</mosaic_0001>

<llo_original>
// kernel: duc_nx_forward.2
$region0: #{duc_nx_forward.2}
  #allocation0 [shape = 'u32[]', space=smem, size = 0x4, offset = 0x4, fixed_abs, tag = 'smem constant byte address 0x4 - core index']
  #allocation1 [shape = 'u32[144,128]{1,0:T(1,128)}', space=vmem, size = 0x12000, scoped, tag = 'internal scratch']
  %s0 = inlined_call_operand.vmem [shape: bf16[2,18,72], index: 0, kind: input, shape index: {}]
  %s1 = inlined_call_operand.hbm [shape: bf16[3,72,256], index: 1, kind: input, shape index: {}]
  %s2 = inlined_call_operand.hbm [shape: f32[1,256], index: 2, kind: input, shape index: {}]
  %s3 = inlined_call_operand.vmem [shape: f32[2,16,256], index: 3, kind: output, shape index: {}]
  %s4 = sld [smem:[#allocation0]]
  $region53: #{duc_nx_forward.2} parent=0
    _
  %s6 = ssub.s32 1, %s4
  %s7 = scalar_select 0, %s6, %s4
  $region1: #{duc_nx_forward.2} parent=0
    #allocation2 [shape = 'u8[110592]{0}', space=vmem, size = 0x1b000, scoped, tag = 'input window, operand 1, single buffered']
    #allocation3 [shape = 's32[2]{0}', space=sflag, size = 0x8, scoped, tag = 'scoped memory for duc_nx_forward.2']
    #allocation4 [shape = 'u8[1024]{0}', space=vmem, size = 0x400, scoped, tag = 'input window, operand 2, single buffered']
    #allocation5 [shape = 's32[1]{0}', space=sflag, size = 0x4, scoped, tag = 'scoped memory for duc_nx_forward.2']
    %8 = vsyncpa [#allocation3], 0
    %9 = vsyncpa [#allocation5], 0
    loop: start=0, step=1, limit=4
    $region2: #{duc_nx_forward.2} parent=1 // loop_pre_header
      _
    $region3: #{duc_nx_forward.2} parent=1 // loop_header
      %s11 = sphi 0, %s15
      %p12 = scmp.ge.s32.totalorder %s11, 4
      %s21 = sphi 0, %s23
      %s24 = sphi 0, %s21
      %s25 = sphi 0, %s24
      %s41 = sphi 0, %s25
      %s45 = sphi 0, %s45
      %s47 = sphi 0, %s45
      %s48 = sphi 0, %s47
      %s62 = sphi 0, %s48
      %s66 = sphi 0, %s66
      %s68 = sphi 0, %s66
      %s69 = sphi 0, %s68
      %s83 = sphi 0, %s69
      %s89 = sphi 0, %s91
      %s92 = sphi 0, %s89
      %s93 = sphi 0, %s92
      %s109 = sphi 0, %s93
    $region4: #{duc_nx_forward.2} parent=1 // loop_header_branch
      %14 = sbr.rel (%p12) target = $region8
    $region5: #{duc_nx_forward.2} parent=1 // loop_body
      %s16 = ssub.s32 %s11, 1
      %s17 = ssub.s32 %s11, 2
      %s18 = sadd.s32 %s11, 1
      %s19 = ssub.s32 %s11, %s18
      %p20 = scmp.eq.s32.totalorder %s19, 0
      %s22 = sadd.s32 %s21, 1
      %s23 = scalar_select %p20, %s21, %s22
      %p26 = pneg %p20
      %p27 = scmp.eq.s32.totalorder %s11, 1
      %p28 = por %p26, %p27
      %p29 = scmp.ne.s32.totalorder %s21, %s24
      %p30 = scmp.eq.s32.totalorder %s11, 0
      %p31 = por %p29, %p30
      %p32 = scmp.ne.s32.totalorder %s21, %s24
      %p33 = scmp.eq.s32.totalorder %s16, 1
      %p34 = por %p32, %p33
      %p35 = scmp.ne.s32.totalorder %s24, %s25
      %p36 = scmp.eq.s32.totalorder %s16, 0
      %p37 = por %p35, %p36
      %p38 = scmp.ne.s32.totalorder %s24, %s25
      %p39 = scmp.eq.s32.totalorder %s17, 1
      %p40 = por %p38, %p39
      %p42 = scmp.ne.s32.totalorder %s25, %s41
      %p43 = scmp.eq.s32.totalorder %s17, 0
      %p44 = por %p42, %p43
      %s46 = sadd.s32 %s45, 1
      %p49 = scmp.eq.s32.totalorder %s11, 1
      %p50 = scmp.ne.s32.totalorder %s45, %s47
      %p51 = scmp.eq.s32.totalorder %s11, 0
      %p52 = por %p50, %p51
      %p53 = scmp.ne.s32.totalorder %s45, %s47
      %p54 = scmp.eq.s32.totalorder %s16, 1
      %p55 = por %p53, %p54
      %p56 = scmp.ne.s32.totalorder %s47, %s48
      %p57 = scmp.eq.s32.totalorder %s16, 0
      %p58 = por %p56, %p57
      %p59 = scmp.ne.s32.totalorder %s47, %s48
      %p60 = scmp.eq.s32.totalorder %s17, 1
      %p61 = por %p59, %p60
      %p63 = scmp.ne.s32.totalorder %s48, %s62
      %p64 = scmp.eq.s32.totalorder %s17, 0
      %p65 = por %p63, %p64
      %s67 = sadd.s32 %s66, 1
      %p70 = scmp.eq.s32.totalorder %s11, 1
      %p71 = scmp.ne.s32.totalorder %s66, %s68
      %p72 = scmp.eq.s32.totalorder %s11, 0
      %p73 = por %p71, %p72
      %p74 = scmp.ne.s32.totalorder %s66, %s68
      %p75 = scmp.eq.s32.totalorder %s16, 1
      %p76 = por %p74, %p75
      %p77 = scmp.ne.s32.totalorder %s68, %s69
      %p78 = scmp.eq.s32.totalorder %s16, 0
      %p79 = por %p77, %p78
      %p80 = scmp.ne.s32.totalorder %s68, %s69
      %p81 = scmp.eq.s32.totalorder %s17, 1
      %p82 = por %p80, %p81
      %p84 = scmp.ne.s32.totalorder %s69, %s83
      %p85 = scmp.eq.s32.totalorder %s17, 0
      %p86 = por %p84, %p85
      %s87 = ssub.s32 %s11, %s18
      %p88 = scmp.eq.s32.totalorder %s87, 0
      %s90 = sadd.s32 %s89, 1
      %s91 = scalar_select %p88, %s89, %s90
      %p94 = pneg %p88
      %p95 = scmp.eq.s32.totalorder %s11, 1
      %p96 = por %p94, %p95
      %p97 = scmp.ne.s32.totalorder %s89, %s92
      %p98 = scmp.eq.s32.totalorder %s11, 0
      %p99 = por %p97, %p98
      %p100 = scmp.ne.s32.totalorder %s89, %s92
      %p101 = scmp.eq.s32.totalorder %s16, 1
      %p102 = por %p100, %p101
      %p103 = scmp.ne.s32.totalorder %s92, %s93
      %p104 = scmp.eq.s32.totalorder %s16, 0
      %p105 = por %p103, %p104
      %p106 = scmp.ne.s32.totalorder %s92, %s93
      %p107 = scmp.eq.s32.totalorder %s17, 1
      %p108 = por %p106, %p107
      %p110 = scmp.ne.s32.totalorder %s93, %s109
      %p111 = scmp.eq.s32.totalorder %s17, 0
      %p112 = por %p110, %p111
      %p113 = scmp.le.s32.totalorder 1, %s11
      %p114 = scmp.lt.s32.totalorder %s11, 3
      %p115 = pnand %p113, %p114
      %p116 = pneg %p115
      // Predicated region
      $region9: #{duc_nx_forward.2} parent=5 // pred_check
        _
      $region10: #{duc_nx_forward.2} parent=5 // pred_check_branch
        %118 = sbr.rel (%p115) target = $region12
      $region11: #{duc_nx_forward.2} parent=5 // pred_region
        %s119 = ssub.s32 %s11, 1
        // Predicated region
        $region13: #{duc_nx_forward.2} parent=11 // pred_check
          %p120 = pneg %p58
        $region14: #{duc_nx_forward.2} parent=11 // pred_check_branch
          %122 = sbr.rel (%p120) target = $region16
        $region15: #{duc_nx_forward.2} parent=11 // pred_region
          %s124 = ssub.s32 3456, 3456
          %125 = vsyncadd [#allocation3], %s124
          %s126 = sshll.u32 [#allocation2], 4
          %s127 = int_to_ptr.vmem [resolvable:$true] %s126
          %132 = dma.hbm_to_vmem [thread:$0]  %s1, 3456, %s127, [#allocation3], 128, 128, 8
        $region16: #{duc_nx_forward.2} parent=11 // pred_fallthru
          _
        // Predicated region
        $region17: #{duc_nx_forward.2} parent=11 // pred_check
          %p133 = pneg %p79
        $region18: #{duc_nx_forward.2} parent=11 // pred_check_branch
          %135 = sbr.rel (%p133) target = $region20
        $region19: #{duc_nx_forward.2} parent=11 // pred_region
          %s137 = ssub.s32 32, 32
          %138 = vsyncadd [#allocation5], %s137
          %s140 = sshll.u32 [#allocation4], 4
          %s141 = int_to_ptr.vmem [resolvable:$true] %s140
          %143 = dma.hbm_to_vmem [thread:$0]  %s2, 32, %s141, [#allocation5]
        $region20: #{duc_nx_forward.2} parent=11 // pred_fallthru
          _
      $region12: #{duc_nx_forward.2} parent=5 // pred_fallthru
        _
      %p144 = scmp.lt.s32.totalorder %s11, 2
      // Predicated region
      $region21: #{duc_nx_forward.2} parent=5 // pred_check
        %p145 = pneg %p144
      $region22: #{duc_nx_forward.2} parent=5 // pred_check_branch
        %147 = sbr.rel (%p145) target = $region24
      $region23: #{duc_nx_forward.2} parent=5 // pred_region
        // Predicated region
        $region25: #{duc_nx_forward.2} parent=23 // pred_check
          %p148 = pneg %p31
        $region26: #{duc_nx_forward.2} parent=23 // pred_check_branch
          %150 = sbr.rel (%p148) target = $region28
        $region27: #{duc_nx_forward.2} parent=23 // pred_region
          %p151 = scmp.lt.s32.totalorder %s11, 1
          %s152 = scalar_select %p151, %s11, 1
          %s153 = smul.addr %s152, 3
          %s154 = smul.addr %s153, 4
          %s155 = scalar_lea.vmem %s0, %s154
        $region28: #{duc_nx_forward.2} parent=23 // pred_fallthru
          _
      $region24: #{duc_nx_forward.2} parent=5 // pred_fallthru
        _
      %p156 = scmp.le.s32.totalorder 1, %s11
      %p157 = scmp.lt.s32.totalorder %s11, 3
      %p158 = pnand %p156, %p157
      %p159 = pneg %p158
      // Predicated region
      $region29: #{duc_nx_forward.2} parent=5 // pred_check
        _
      $region30: #{duc_nx_forward.2} parent=5 // pred_check_branch
        %161 = sbr.rel (%p158) target = $region32
      $region31: #{duc_nx_forward.2} parent=5 // pred_region
        %s162 = ssub.s32 %s11, 1
        // Predicated region
        $region33: #{duc_nx_forward.2} parent=31 // pred_check
          %p163 = pneg %p58
        $region34: #{duc_nx_forward.2} parent=31 // pred_check_branch
          %165 = sbr.rel (%p163) target = $region36
        $region35: #{duc_nx_forward.2} parent=31 // pred_region
          %166 = dma.done [#allocation3], 3456
        $region36: #{duc_nx_forward.2} parent=31 // pred_fallthru
          _
        // Predicated region
        $region37: #{duc_nx_forward.2} parent=31 // pred_check
          %p167 = pneg %p79
        $region38: #{duc_nx_forward.2} parent=31 // pred_check_branch
          %169 = sbr.rel (%p167) target = $region40
        $region39: #{duc_nx_forward.2} parent=31 // pred_region
          %170 = dma.done [#allocation5], 32
        $region40: #{duc_nx_forward.2} parent=31 // pred_fallthru
          _
        %p171 = scmp.lt.s32.totalorder %s16, 1
        %s172 = scalar_select %p171, %s16, 1
        %s173 = smul.addr %s172, 3
        %s174 = smul.addr %s173, 4
        %s175 = scalar_lea.vmem %s0, %s174
        %p176 = pneg %p37
        %p177 = pneg %p34
        %p178 = pneg %p58
        %p179 = pneg %p55
        %p180 = pneg %p79
        %p181 = pneg %p76
        %p182 = pneg %p105
        %p183 = pneg %p102
        %p184 = scmp.lt.s32.totalorder %s16, 1
        %s185 = scalar_select %p184, %s16, 1
        %s186 = smul.addr %s185, 4
        %s187 = smul.addr %s186, 8
        %s188 = scalar_lea.vmem %s3, %s187
        %p189 = scmp.lt.s32.totalorder %s16, 1
        %s190 = scalar_select %p189, %s16, 1
        %s191 = smul.addr %s190, 3
        %s192 = smul.addr %s191, 4
        %s193 = scalar_lea.vmem %s0, %s192
        %p194 = scmp.lt.s32.totalorder %s16, 1
        %s195 = scalar_select %p194, %s16, 1
        %s196 = smul.addr %s195, 4
        %s197 = smul.addr %s196, 8
        %s198 = scalar_lea.vmem %s3, %s197
        %v200 = vld [vmem:[%s193] sm:$0xf]
        %v201 = vld [vmem:[%s193 + $0x4] sm:$0xf]
        %v202 = vld [vmem:[#allocation2] sm:$0xff]
        %v203 = vld [vmem:[#allocation2 + $0x8] sm:$0xff]
        %v204 = vld [vmem:[#allocation2 + $0x10] sm:$0xff]
        %v205 = vld [vmem:[#allocation2 + $0x18] sm:$0xff]
        %v206 = vld [vmem:[#allocation2 + $0x20] sm:$0xff]
        %v207 = vld [vmem:[#allocation2 + $0x28] sm:$0xff]
        %v208 = vld [vmem:[#allocation2 + $0x30] sm:$0xff]
        %v209 = vld [vmem:[#allocation2 + $0x38] sm:$0xff]
        %v210 = vld [vmem:[#allocation2 + $0x40] sm:$0xff]
        %v211 = vld [vmem:[%s193 + $0x8] sm:$0x1]
        %s212 = scalar_lea.vmem [#allocation2], 72
        %v213 = vld [vmem:[%s212] sm:$0xff]
        %v214 = vld [vmem:[%s212 + $0x8] sm:$0xff]
        %v215 = vld [vmem:[%s212 + $0x10] sm:$0xff]
        %v216 = vld [vmem:[%s212 + $0x18] sm:$0xff]
        %v217 = vld [vmem:[%s212 + $0x20] sm:$0xff]
        %v218 = vld [vmem:[%s212 + $0x28] sm:$0xff]
        %v219 = vld [vmem:[%s212 + $0x30] sm:$0xff]
        %v220 = vld [vmem:[%s212 + $0x38] sm:$0xff]
        %v221 = vld [vmem:[%s212 + $0x40] sm:$0xff]
        %v225 = vunpack.c.l.b16 %v200
        %v226 = vunpack.c.l.b16 %v201
        %v227 = vunpack.c.l.b16 %v211
        %v228 = vpack.c.b16 %v226, %v225
        %v229 = vpack.c.b16 %v227, %v227
        %vm230 = vsmask.f32 7424
        %v232 = vshrl.u32 %v228, 16
        %v234 = vshll.u32 %v228, 16
        %v236 = vrot.slane %v234, 1
        %v237 = vor.u32 %v232, %v236
        %v239 = vshll.u32 %v229, 16
        %v241 = vrot.slane %v239, 1
        %v242 = vsel %vm230, %v237, %v241
        %v252 = vunpack.c.l.b16 %v213
        %v253 = vunpack.c.h.b16 %v213
        %v254 = vunpack.c.l.b16 %v214
        %v255 = vunpack.c.h.b16 %v214
        %v256 = vunpack.c.l.b16 %v215
        %v257 = vunpack.c.h.b16 %v215
        %v258 = vunpack.c.l.b16 %v216
        %v259 = vunpack.c.h.b16 %v216
        %v260 = vunpack.c.l.b16 %v217
        %v261 = vunpack.c.h.b16 %v217
        %v262 = vunpack.c.l.b16 %v218
        %v263 = vunpack.c.h.b16 %v218
        %v264 = vunpack.c.l.b16 %v219
        %v265 = vunpack.c.h.b16 %v219
        %v266 = vunpack.c.l.b16 %v220
        %v267 = vunpack.c.h.b16 %v220
        %v268 = vunpack.c.l.b16 %v221
        %v269 = vunpack.c.h.b16 %v221
        %v270 = vpack.c.b16 %v254, %v252
        %v271 = vpack.c.b16 %v255, %v253
        %v272 = vpack.c.b16 %v258, %v256
        %v273 = vpack.c.b16 %v259, %v257
        %v274 = vpack.c.b16 %v262, %v260
        %v275 = vpack.c.b16 %v263, %v261
        %v276 = vpack.c.b16 %v266, %v264
        %v277 = vpack.c.b16 %v267, %v265
        %v278 = vpack.c.b16 %v268, %v268
        %v279 = vpack.c.b16 %v269, %v269
        %vm288 = vcmask 588800
        %v290 = vsel %vm288, %v242, 0
        %vm292 = vcmask 1043456
        %v294 = vsel %vm292, %v278, 0
        %v297 = vsel %vm292, %v279, 0
        %299 = vmatprep.subr.bf16.mxu0 %v271
        %300 = vmatpush1.bf16.msra.mxu0 %v270
        %301 = vmatprep.subr.bf16.mxu0 %v273
        %302 = vmatpush1.bf16.msra.mxu0 %v272
        %303 = vmatprep.subr.bf16.mxu0 %v275
        %304 = vmatpush1.bf16.msra.mxu0 %v274
        %305 = vmatprep.subr.bf16.mxu0 %v277
        %306 = vmatpush1.bf16.msra.mxu0 %v276
        %307 = vmatprep.subr.bf16.mxu0 %v297
        %308 = vmatpush1.bf16.msra.mxu0 %v294
        %309 = vmatprep.subr.bf16.mxu0 0
        %310 = vmatpush1.bf16.msra.mxu0 0
        %311 = vmatprep.subr.bf16.mxu0 0
        %312 = vmatpush1.bf16.msra.mxu0 0
        %313 = vmatprep.subr.bf16.mxu0 0
        %314 = vmatpush1.bf16.msra.mxu0 0
        %315 = vmatprep.subr.bf16.mxu0 0
        %316 = vmatpush1.bf16.msra.mxu0 0
        %317 = vmatprep.subr.bf16.mxu0 0
        %318 = vmatpush1.bf16.msra.mxu0 0
        %319 = vmatprep.subr.bf16.mxu0 0
        %320 = vmatpush1.bf16.msra.mxu0 0
        %321 = vmatprep.subr.bf16.mxu0 0
        %322 = vmatpush1.bf16.msra.mxu0 0
        %323 = vmatprep.subr.bf16.mxu0 0
        %324 = vmatpush1.bf16.msra.mxu0 0
        %325 = vmatprep.subr.bf16.mxu0 0
        %326 = vmatpush1.bf16.msra.mxu0 0
        %327 = vmatprep.subr.bf16.mxu0 0
        %328 = vmatpush1.bf16.msra.mxu0 0
        %329 = vmatprep.subr.bf16.mxu0 0
        %330 = vmatpush1.bf16.msra.mxu0 0
        %331 = vmatprep.mubr.bf16.mxu0 0
        %332 = vmatmul.mubr.bf16.gmra.mrb[0].mxu0 %v290
        %v333 = vpop.f32.mrb[0].mxu0
        %v334 = vadd.f32 0.0, %v333
        %v335 = vpop.f32.mrb[0].mxu0
        %v336 = vadd.f32 0.0, %v335
        %v337 = vpop.f32.mrb[0].mxu0
        %v338 = vadd.f32 0.0, %v337
        %v339 = vpop.f32.mrb[0].mxu0
        %v340 = vadd.f32 0.0, %v339
        %341 = vdwg.mxu0
        %v351 = vunpack.c.l.b16 %v202
        %v352 = vunpack.c.h.b16 %v202
        %v353 = vunpack.c.l.b16 %v203
        %v354 = vunpack.c.h.b16 %v203
        %v355 = vunpack.c.l.b16 %v204
        %v356 = vunpack.c.h.b16 %v204
        %v357 = vunpack.c.l.b16 %v205
        %v358 = vunpack.c.h.b16 %v205
        %v359 = vunpack.c.l.b16 %v206
        %v360 = vunpack.c.h.b16 %v206
        %v361 = vunpack.c.l.b16 %v207
        %v362 = vunpack.c.h.b16 %v207
        %v363 = vunpack.c.l.b16 %v208
        %v364 = vunpack.c.h.b16 %v208
        %v365 = vunpack.c.l.b16 %v209
        %v366 = vunpack.c.h.b16 %v209
        %v367 = vunpack.c.l.b16 %v210
        %v368 = vunpack.c.h.b16 %v210
        %v369 = vpack.c.b16 %v353, %v351
        %v370 = vpack.c.b16 %v354, %v352
        %v371 = vpack.c.b16 %v357, %v355
        %v372 = vpack.c.b16 %v358, %v356
        %v373 = vpack.c.b16 %v361, %v359
        %v374 = vpack.c.b16 %v362, %v360
        %v375 = vpack.c.b16 %v365, %v363
        %v376 = vpack.c.b16 %v366, %v364
        %v377 = vpack.c.b16 %v367, %v367
        %v378 = vpack.c.b16 %v368, %v368
        %v387 = vsel %vm288, %v228, 0
        %v390 = vsel %vm292, %v377, 0
        %v393 = vsel %vm292, %v378, 0
        %395 = vmatprep.subr.bf16.mxu0 %v370
        %396 = vmatpush1.bf16.msra.mxu0 %v369
        %397 = vmatprep.subr.bf16.mxu0 %v372
        %398 = vmatpush1.bf16.msra.mxu0 %v371
        %399 = vmatprep.subr.bf16.mxu0 %v374
        %400 = vmatpush1.bf16.msra.mxu0 %v373
        %401 = vmatprep.subr.bf16.mxu0 %v376
        %402 = vmatpush1.bf16.msra.mxu0 %v375
        %403 = vmatprep.subr.bf16.mxu0 %v393
        %404 = vmatpush1.bf16.msra.mxu0 %v390
        %405 = vmatprep.subr.bf16.mxu0 0
        %406 = vmatpush1.bf16.msra.mxu0 0
        %407 = vmatprep.subr.bf16.mxu0 0
        %408 = vmatpush1.bf16.msra.mxu0 0
        %409 = vmatprep.subr.bf16.mxu0 0
        %410 = vmatpush1.bf16.msra.mxu0 0
        %411 = vmatprep.subr.bf16.mxu0 0
        %412 = vmatpush1.bf16.msra.mxu0 0
        %413 = vmatprep.subr.bf16.mxu0 0
        %414 = vmatpush1.bf16.msra.mxu0 0
        %415 = vmatprep.subr.bf16.mxu0 0
        %416 = vmatpush1.bf16.msra.mxu0 0
        %417 = vmatprep.subr.bf16.mxu0 0
        %418 = vmatpush1.bf16.msra.mxu0 0
        %419 = vmatprep.subr.bf16.mxu0 0
        %420 = vmatpush1.bf16.msra.mxu0 0
        %421 = vmatprep.subr.bf16.mxu0 0
        %422 = vmatpush1.bf16.msra.mxu0 0
        %423 = vmatprep.subr.bf16.mxu0 0
        %424 = vmatpush1.bf16.msra.mxu0 0
        %425 = vmatprep.subr.bf16.mxu0 0
        %426 = vmatpush1.bf16.msra.mxu0 0
        %427 = vmatprep.mubr.bf16.mxu0 0
        %428 = vmatmul.mubr.bf16.gmra.mrb[0].mxu0 %v387
        %v429 = vpop.f32.mrb[0].mxu0
        %v430 = vadd.f32 %v334, %v429
        %v431 = vpop.f32.mrb[0].mxu0
        %v432 = vadd.f32 %v336, %v431
        %v433 = vpop.f32.mrb[0].mxu0
        %v434 = vadd.f32 %v338, %v433
        %v435 = vpop.f32.mrb[0].mxu0
        %v436 = vadd.f32 %v340, %v435
        %437 = vdwg.mxu0
        %v438 = vld [vmem:[%s193] sm:$0xe]
        %s439 = scalar_lea.vmem [#allocation2], 144
        %v440 = vld [vmem:[%s439] sm:$0xff]
        %v441 = vld [vmem:[%s439 + $0x8] sm:$0xff]
        %v442 = vld [vmem:[%s439 + $0x10] sm:$0xff]
        %v443 = vld [vmem:[%s439 + $0x18] sm:$0xff]
        %v444 = vld [vmem:[%s439 + $0x20] sm:$0xff]
        %v445 = vld [vmem:[%s439 + $0x28] sm:$0xff]
        %v446 = vld [vmem:[%s439 + $0x30] sm:$0xff]
        %v447 = vld [vmem:[%s439 + $0x38] sm:$0xff]
        %v448 = vld [vmem:[%s439 + $0x40] sm:$0xff]
        %v450 = vunpack.c.l.b16 %v438
        %v451 = vpack.c.b16 %v226, %v450
        %vm452 = vcmask 1046528
        %v453 = vrot.slane %v451, 1
        %v454 = vrot.slane %v229, 1
        %v455 = vsel %vm452, %v453, %v454
        %v465 = vunpack.c.l.b16 %v440
        %v466 = vunpack.c.h.b16 %v440
        %v467 = vunpack.c.l.b16 %v441
        %v468 = vunpack.c.h.b16 %v441
        %v469 = vunpack.c.l.b16 %v442
        %v470 = vunpack.c.h.b16 %v442
        %v471 = vunpack.c.l.b16 %v443
        %v472 = vunpack.c.h.b16 %v443
        %v473 = vunpack.c.l.b16 %v444
        %v474 = vunpack.c.h.b16 %v444
        %v475 = vunpack.c.l.b16 %v445
        %v476 = vunpack.c.h.b16 %v445
        %v477 = vunpack.c.l.b16 %v446
        %v478 = vunpack.c.h.b16 %v446
        %v479 = vunpack.c.l.b16 %v447
        %v480 = vunpack.c.h.b16 %v447
        %v481 = vunpack.c.l.b16 %v448
        %v482 = vunpack.c.h.b16 %v448
        %v483 = vpack.c.b16 %v467, %v465
        %v484 = vpack.c.b16 %v468, %v466
        %v485 = vpack.c.b16 %v471, %v469
        %v486 = vpack.c.b16 %v472, %v470
        %v487 = vpack.c.b16 %v475, %v473
        %v488 = vpack.c.b16 %v476, %v474
        %v489 = vpack.c.b16 %v479, %v477
        %v490 = vpack.c.b16 %v480, %v478
        %v491 = vpack.c.b16 %v481, %v481
        %v492 = vpack.c.b16 %v482, %v482
        %v502 = vsel %vm288, %v455, 0
        %v505 = vsel %vm292, %v491, 0
        %v508 = vsel %vm292, %v492, 0
        %510 = vmatprep.subr.bf16.mxu0 %v484
        %511 = vmatpush1.bf16.msra.mxu0 %v483
        %512 = vmatprep.subr.bf16.mxu0 %v486
        %513 = vmatpush1.bf16.msra.mxu0 %v485
        %514 = vmatprep.subr.bf16.mxu0 %v488
        %515 = vmatpush1.bf16.msra.mxu0 %v487
        %516 = vmatprep.subr.bf16.mxu0 %v490
        %517 = vmatpush1.bf16.msra.mxu0 %v489
        %518 = vmatprep.subr.bf16.mxu0 %v508
        %519 = vmatpush1.bf16.msra.mxu0 %v505
        %520 = vmatprep.subr.bf16.mxu0 0
        %521 = vmatpush1.bf16.msra.mxu0 0
        %522 = vmatprep.subr.bf16.mxu0 0
        %523 = vmatpush1.bf16.msra.mxu0 0
        %524 = vmatprep.subr.bf16.mxu0 0
        %525 = vmatpush1.bf16.msra.mxu0 0
        %526 = vmatprep.subr.bf16.mxu0 0
        %527 = vmatpush1.bf16.msra.mxu0 0
        %528 = vmatprep.subr.bf16.mxu0 0
        %529 = vmatpush1.bf16.msra.mxu0 0
        %530 = vmatprep.subr.bf16.mxu0 0
        %531 = vmatpush1.bf16.msra.mxu0 0
        %532 = vmatprep.subr.bf16.mxu0 0
        %533 = vmatpush1.bf16.msra.mxu0 0
        %534 = vmatprep.subr.bf16.mxu0 0
        %535 = vmatpush1.bf16.msra.mxu0 0
        %536 = vmatprep.subr.bf16.mxu0 0
        %537 = vmatpush1.bf16.msra.mxu0 0
        %538 = vmatprep.subr.bf16.mxu0 0
        %539 = vmatpush1.bf16.msra.mxu0 0
        %540 = vmatprep.subr.bf16.mxu0 0
        %541 = vmatpush1.bf16.msra.mxu0 0
        %542 = vmatprep.mubr.bf16.mxu0 0
        %543 = vmatmul.mubr.bf16.gmra.mrb[0].mxu0 %v502
        %v544 = vpop.f32.mrb[0].mxu0
        %v545 = vadd.f32 0.0, %v544
        %v546 = vpop.f32.mrb[0].mxu0
        %v547 = vadd.f32 0.0, %v546
        %v548 = vpop.f32.mrb[0].mxu0
        %v549 = vadd.f32 0.0, %v548
        %v550 = vpop.f32.mrb[0].mxu0
        %v551 = vadd.f32 0.0, %v550
        %552 = vdwg.mxu0
        %v553 = vadd.f32 %v430, %v545
        %v554 = vadd.f32 %v432, %v547
        %v555 = vadd.f32 %v434, %v549
        %v556 = vadd.f32 %v436, %v551
        %v557 = vld [vmem:[#allocation4] sm:$0x3]
        %v559 = vlaneseq
        %v560 = vshrl.u32 %v559, 7
        %v561 = vsub.s32 0, %v560
        %v562 = vrot.slane %v557, %v561
        %v563 = vlaneseq
        %v564 = vshrl.u32 %v563, 7
        %v565 = vsub.s32 1, %v564
        %v566 = vrot.slane %v557, %v565
        %v569 = vadd.f32 %v553, %v562
        %v570 = vadd.f32 %v554, %v566
        %v571 = vadd.f32 %v555, %v562
        %v572 = vadd.f32 %v556, %v566
        %v573 = vmax.f32 %v569, 0.0
        %v574 = vmax.f32 %v570, 0.0
        %v575 = vmax.f32 %v571, 0.0
        %v576 = vmax.f32 %v572, 0.0
        %577 = vst [vmem:[%s198] sm:$0xff] %v573
        %578 = vst [vmem:[%s198 + $0x8] sm:$0xff] %v574
        %579 = vst [vmem:[%s198 + $0x10] sm:$0xff] %v575
        %580 = vst [vmem:[%s198 + $0x18] sm:$0xff] %v576
        %p581 = scmp.lt.s32.totalorder %s16, 1
        %s582 = scalar_select %p581, %s16, 1
        %s583 = smul.addr %s582, 4
        %s584 = smul.addr %s583, 8
        %s585 = scalar_lea.vmem %s3, %s584
        // Predicated region
        $region41: #{duc_nx_forward.2} parent=31 // pred_check
          %p586 = pneg %p102
        $region42: #{duc_nx_forward.2} parent=31 // pred_check_branch
          %588 = sbr.rel (%p586) target = $region44
        $region43: #{duc_nx_forward.2} parent=31 // pred_region
          _
        $region44: #{duc_nx_forward.2} parent=31 // pred_fallthru
          _
      $region32: #{duc_nx_forward.2} parent=5 // pred_fallthru
        _
      %p589 = scmp.le.s32.totalorder 2, %s11
      // Predicated region
      $region45: #{duc_nx_forward.2} parent=5 // pred_check
        %p590 = pneg %p589
      $region46: #{duc_nx_forward.2} parent=5 // pred_check_branch
        %592 = sbr.rel (%p590) target = $region48
      $region47: #{duc_nx_forward.2} parent=5 // pred_region
        %s593 = ssub.s32 %s11, 2
        // Predicated region
        $region49: #{duc_nx_forward.2} parent=47 // pred_check
          %p594 = pneg %p108
        $region50: #{duc_nx_forward.2} parent=47 // pred_check_branch
          %596 = sbr.rel (%p594) target = $region52
        $region51: #{duc_nx_forward.2} parent=47 // pred_region
          %p597 = scmp.lt.s32.totalorder %s17, 1
          %s598 = scalar_select %p597, %s17, 1
          %s599 = smul.addr %s598, 4
          %s600 = smul.addr %s599, 8
          %s601 = scalar_lea.vmem %s3, %s600
        $region52: #{duc_nx_forward.2} parent=47 // pred_fallthru
          _
      $region48: #{duc_nx_forward.2} parent=5 // pred_fallthru
        _
    $region6: #{duc_nx_forward.2} parent=1 // loop_footer
      %s15 = sadd.s32 1, %s11
    $region7: #{duc_nx_forward.2} parent=1 // loop_footer_branch
      %10 = sbr.rel target = $region3
    $region8: #{duc_nx_forward.2} parent=1 // loop_exit
      _
    %602 = vsyncpa [#allocation3], 1
    %s603 = scalar_lea.sflag [#allocation3], 1
    %604 = vsyncpa %s603, 1
    %605 = vsyncpa [#allocation5], 1

// kernel: duc_nx_forward.3
$region0: #{duc_nx_forward.3}
  #allocation0 [shape = 'u32[]', space=smem, size = 0x4, offset = 0x4, fixed_abs, tag = 'smem constant byte address 0x4 - core index']
  #allocation1 [shape = 'u32[144,128]{1,0:T(1,128)}', space=vmem, size = 0x12000, scoped, tag = 'internal scratch']
  %s0 = inlined_call_operand.vmem [shape: bf16[2,34,136], index: 0, kind: input, shape index: {}]
  %s1 = inlined_call_operand.hbm [shape: bf16[3,136,256], index: 1, kind: input, shape index: {}]
  %s2 = inlined_call_operand.hbm [shape: f32[1,256], index: 2, kind: input, shape index: {}]
  %s3 = inlined_call_operand.vmem [shape: f32[2,32,256], index: 3, kind: output, shape index: {}]
  %s4 = sld [smem:[#allocation0]]
  $region53: #{duc_nx_forward.3} parent=0
    _
  %s6 = ssub.s32 1, %s4
  %s7 = scalar_select 0, %s6, %s4
  $region1: #{duc_nx_forward.3} parent=0
    #allocation2 [shape = 'u8[208896]{0}', space=vmem, size = 0x33000, scoped, tag = 'input window, operand 1, single buffered']
    #allocation3 [shape = 's32[2]{0}', space=sflag, size = 0x8, scoped, tag = 'scoped memory for duc_nx_forward.3']
    #allocation4 [shape = 'u8[1024]{0}', space=vmem, size = 0x400, scoped, tag = 'input window, operand 2, single buffered']
    #allocation5 [shape = 's32[1]{0}', space=sflag, size = 0x4, scoped, tag = 'scoped memory for duc_nx_forward.3']
    %8 = vsyncpa [#allocation3], 0
    %9 = vsyncpa [#allocation5], 0
    loop: start=0, step=1, limit=4
    $region2: #{duc_nx_forward.3} parent=1 // loop_pre_header
      _
    $region3: #{duc_nx_forward.3} parent=1 // loop_header
      %s11 = sphi 0, %s15
      %p12 = scmp.ge.s32.totalorder %s11, 4
      %s21 = sphi 0, %s23
      %s24 = sphi 0, %s21
      %s25 = sphi 0, %s24
      %s41 = sphi 0, %s25
      %s45 = sphi 0, %s45
      %s47 = sphi 0, %s45
      %s48 = sphi 0, %s47
      %s62 = sphi 0, %s48
      %s66 = sphi 0, %s66
      %s68 = sphi 0, %s66
      %s69 = sphi 0, %s68
      %s83 = sphi 0, %s69
      %s89 = sphi 0, %s91
      %s92 = sphi 0, %s89
      %s93 = sphi 0, %s92
      %s109 = sphi 0, %s93
    $region4: #{duc_nx_forward.3} parent=1 // loop_header_branch
      %14 = sbr.rel (%p12) target = $region8
    $region5: #{duc_nx_forward.3} parent=1 // loop_body
      %s16 = ssub.s32 %s11, 1
      %s17 = ssub.s32 %s11, 2
      %s18 = sadd.s32 %s11, 1
      %s19 = ssub.s32 %s11, %s18
      %p20 = scmp.eq.s32.totalorder %s19, 0
      %s22 = sadd.s32 %s21, 1
      %s23 = scalar_select %p20, %s21, %s22
      %p26 = pneg %p20
      %p27 = scmp.eq.s32.totalorder %s11, 1
      %p28 = por %p26, %p27
      %p29 = scmp.ne.s32.totalorder %s21, %s24
      %p30 = scmp.eq.s32.totalorder %s11, 0
      %p31 = por %p29, %p30
      %p32 = scmp.ne.s32.totalorder %s21, %s24
      %p33 = scmp.eq.s32.totalorder %s16, 1
      %p34 = por %p32, %p33
      %p35 = scmp.ne.s32.totalorder %s24, %s25
      %p36 = scmp.eq.s32.totalorder %s16, 0
      %p37 = por %p35, %p36
      %p38 = scmp.ne.s32.totalorder %s24, %s25
      %p39 = scmp.eq.s32.totalorder %s17, 1
      %p40 = por %p38, %p39
      %p42 = scmp.ne.s32.totalorder %s25, %s41
      %p43 = scmp.eq.s32.totalorder %s17, 0
      %p44 = por %p42, %p43
      %s46 = sadd.s32 %s45, 1
      %p49 = scmp.eq.s32.totalorder %s11, 1
      %p50 = scmp.ne.s32.totalorder %s45, %s47
      %p51 = scmp.eq.s32.totalorder %s11, 0
      %p52 = por %p50, %p51
      %p53 = scmp.ne.s32.totalorder %s45, %s47
      %p54 = scmp.eq.s32.totalorder %s16, 1
      %p55 = por %p53, %p54
      %p56 = scmp.ne.s32.totalorder %s47, %s48
      %p57 = scmp.eq.s32.totalorder %s16, 0
      %p58 = por %p56, %p57
      %p59 = scmp.ne.s32.totalorder %s47, %s48
      %p60 = scmp.eq.s32.totalorder %s17, 1
      %p61 = por %p59, %p60
      %p63 = scmp.ne.s32.totalorder %s48, %s62
      %p64 = scmp.eq.s32.totalorder %s17, 0
      %p65 = por %p63, %p64
      %s67 = sadd.s32 %s66, 1
      %p70 = scmp.eq.s32.totalorder %s11, 1
      %p71 = scmp.ne.s32.totalorder %s66, %s68
      %p72 = scmp.eq.s32.totalorder %s11, 0
      %p73 = por %p71, %p72
      %p74 = scmp.ne.s32.totalorder %s66, %s68
      %p75 = scmp.eq.s32.totalorder %s16, 1
      %p76 = por %p74, %p75
      %p77 = scmp.ne.s32.totalorder %s68, %s69
      %p78 = scmp.eq.s32.totalorder %s16, 0
      %p79 = por %p77, %p78
      %p80 = scmp.ne.s32.totalorder %s68, %s69
      %p81 = scmp.eq.s32.totalorder %s17, 1
      %p82 = por %p80, %p81
      %p84 = scmp.ne.s32.totalorder %s69, %s83
      %p85 = scmp.eq.s32.totalorder %s17, 0
      %p86 = por %p84, %p85
      %s87 = ssub.s32 %s11, %s18
      %p88 = scmp.eq.s32.totalorder %s87, 0
      %s90 = sadd.s32 %s89, 1
      %s91 = scalar_select %p88, %s89, %s90
      %p94 = pneg %p88
      %p95 = scmp.eq.s32.totalorder %s11, 1
      %p96 = por %p94, %p95
      %p97 = scmp.ne.s32.totalorder %s89, %s92
      %p98 = scmp.eq.s32.totalorder %s11, 0
      %p99 = por %p97, %p98
      %p100 = scmp.ne.s32.totalorder %s89, %s92
      %p101 = scmp.eq.s32.totalorder %s16, 1
      %p102 = por %p100, %p101
      %p103 = scmp.ne.s32.totalorder %s92, %s93
      %p104 = scmp.eq.s32.totalorder %s16, 0
      %p105 = por %p103, %p104
      %p106 = scmp.ne.s32.totalorder %s92, %s93
      %p107 = scmp.eq.s32.totalorder %s17, 1
      %p108 = por %p106, %p107
      %p110 = scmp.ne.s32.totalorder %s93, %s109
      %p111 = scmp.eq.s32.totalorder %s17, 0
      %p112 = por %p110, %p111
      %p113 = scmp.le.s32.totalorder 1, %s11
      %p114 = scmp.lt.s32.totalorder %s11, 3
      %p115 = pnand %p113, %p114
      %p116 = pneg %p115
      // Predicated region
      $region9: #{duc_nx_forward.3} parent=5 // pred_check
        _
      $region10: #{duc_nx_forward.3} parent=5 // pred_check_branch
        %118 = sbr.rel (%p115) target = $region12
      $region11: #{duc_nx_forward.3} parent=5 // pred_region
        %s119 = ssub.s32 %s11, 1
        // Predicated region
        $region13: #{duc_nx_forward.3} parent=11 // pred_check
          %p120 = pneg %p58
        $region14: #{duc_nx_forward.3} parent=11 // pred_check_branch
          %122 = sbr.rel (%p120) target = $region16
        $region15: #{duc_nx_forward.3} parent=11 // pred_region
          %s124 = ssub.s32 6528, 6528
          %125 = vsyncadd [#allocation3], %s124
          %s126 = sshll.u32 [#allocation2], 4
          %s127 = int_to_ptr.vmem [resolvable:$true] %s126
          %132 = dma.hbm_to_vmem [thread:$0]  %s1, 6528, %s127, [#allocation3], 128, 128, 8
        $region16: #{duc_nx_forward.3} parent=11 // pred_fallthru
          _
        // Predicated region
        $region17: #{duc_nx_forward.3} parent=11 // pred_check
          %p133 = pneg %p79
        $region18: #{duc_nx_forward.3} parent=11 // pred_check_branch
          %135 = sbr.rel (%p133) target = $region20
        $region19: #{duc_nx_forward.3} parent=11 // pred_region
          %s137 = ssub.s32 32, 32
          %138 = vsyncadd [#allocation5], %s137
          %s140 = sshll.u32 [#allocation4], 4
          %s141 = int_to_ptr.vmem [resolvable:$true] %s140
          %143 = dma.hbm_to_vmem [thread:$0]  %s2, 32, %s141, [#allocation5]
        $region20: #{duc_nx_forward.3} parent=11 // pred_fallthru
          _
      $region12: #{duc_nx_forward.3} parent=5 // pred_fallthru
        _
      %p144 = scmp.lt.s32.totalorder %s11, 2
      // Predicated region
      $region21: #{duc_nx_forward.3} parent=5 // pred_check
        %p145 = pneg %p144
      $region22: #{duc_nx_forward.3} parent=5 // pred_check_branch
        %147 = sbr.rel (%p145) target = $region24
      $region23: #{duc_nx_forward.3} parent=5 // pred_region
        // Predicated region
        $region25: #{duc_nx_forward.3} parent=23 // pred_check
          %p148 = pneg %p31
        $region26: #{duc_nx_forward.3} parent=23 // pred_check_branch
          %150 = sbr.rel (%p148) target = $region28
        $region27: #{duc_nx_forward.3} parent=23 // pred_region
          %p151 = scmp.lt.s32.totalorder %s11, 1
          %s152 = scalar_select %p151, %s11, 1
          %s153 = smul.addr %s152, 10
          %s154 = smul.addr %s153, 4
          %s155 = scalar_lea.vmem %s0, %s154
        $region28: #{duc_nx_forward.3} parent=23 // pred_fallthru
          _
      $region24: #{duc_nx_forward.3} parent=5 // pred_fallthru
        _
      %p156 = scmp.le.s32.totalorder 1, %s11
      %p157 = scmp.lt.s32.totalorder %s11, 3
      %p158 = pnand %p156, %p157
      %p159 = pneg %p158
      // Predicated region
      $region29: #{duc_nx_forward.3} parent=5 // pred_check
        _
      $region30: #{duc_nx_forward.3} parent=5 // pred_check_branch
        %161 = sbr.rel (%p158) target = $region32
      $region31: #{duc_nx_forward.3} parent=5 // pred_region
        %s162 = ssub.s32 %s11, 1
        // Predicated region
        $region33: #{duc_nx_forward.3} parent=31 // pred_check
          %p163 = pneg %p58
        $region34: #{duc_nx_forward.3} parent=31 // pred_check_branch
          %165 = sbr.rel (%p163) target = $region36
        $region35: #{duc_nx_forward.3} parent=31 // pred_region
          %166 = dma.done [#allocation3], 6528
        $region36: #{duc_nx_forward.3} parent=31 // pred_fallthru
          _
        // Predicated region
        $region37: #{duc_nx_forward.3} parent=31 // pred_check
          %p167 = pneg %p79
        $region38: #{duc_nx_forward.3} parent=31 // pred_check_branch
          %169 = sbr.rel (%p167) target = $region40
        $region39: #{duc_nx_forward.3} parent=31 // pred_region
          %170 = dma.done [#allocation5], 32
        $region40: #{duc_nx_forward.3} parent=31 // pred_fallthru
          _
        %p171 = scmp.lt.s32.totalorder %s16, 1
        %s172 = scalar_select %p171, %s16, 1
        %s173 = smul.addr %s172, 10
        %s174 = smul.addr %s173, 4
        %s175 = scalar_lea.vmem %s0, %s174
        %p176 = pneg %p37
        %p177 = pneg %p34
        %p178 = pneg %p58
        %p179 = pneg %p55
        %p180 = pneg %p79
        %p181 = pneg %p76
        %p182 = pneg %p105
        %p183 = pneg %p102
        %p184 = scmp.lt.s32.totalorder %s16, 1
        %s185 = scalar_select %p184, %s16, 1
        %s186 = smul.addr %s185, 8
        %s187 = smul.addr %s186, 8
        %s188 = scalar_lea.vmem %s3, %s187
        %p189 = scmp.lt.s32.totalorder %s16, 1
        %s190 = scalar_select %p189, %s16, 1
        %s191 = smul.addr %s190, 10
        %s192 = smul.addr %s191, 4
        %s193 = scalar_lea.vmem %s0, %s192
        %p194 = scmp.lt.s32.totalorder %s16, 1
        %s195 = scalar_select %p194, %s16, 1
        %s196 = smul.addr %s195, 8
        %s197 = smul.addr %s196, 8
        %s198 = scalar_lea.vmem %s3, %s197
        %v200 = vld [vmem:[%s193] sm:$0xff]
        %v201 = vld [vmem:[%s193 + $0x8] sm:$0xff]
        %v202 = vld [vmem:[%s193 + $0x10] sm:$0xff]
        %v203 = vld [vmem:[%s193 + $0x18] sm:$0xff]
        %v204 = vld [vmem:[#allocation2] sm:$0xff]
        %v205 = vld [vmem:[#allocation2 + $0x8] sm:$0xff]
        %v206 = vld [vmem:[#allocation2 + $0x10] sm:$0xff]
        %v207 = vld [vmem:[#allocation2 + $0x18] sm:$0xff]
        %v208 = vld [vmem:[#allocation2 + $0x20] sm:$0xff]
        %v209 = vld [vmem:[#allocation2 + $0x28] sm:$0xff]
        %v210 = vld [vmem:[#allocation2 + $0x30] sm:$0xff]
        %v211 = vld [vmem:[#allocation2 + $0x38] sm:$0xff]
        %v212 = vld [vmem:[#allocation2 + $0x40] sm:$0xff]
        %v213 = vld [vmem:[#allocation2 + $0x48] sm:$0xff]
        %v214 = vld [vmem:[#allocation2 + $0x50] sm:$0xff]
        %v215 = vld [vmem:[#allocation2 + $0x58] sm:$0xff]
        %v216 = vld [vmem:[#allocation2 + $0x60] sm:$0xff]
        %v217 = vld [vmem:[#allocation2 + $0x68] sm:$0xff]
        %v218 = vld [vmem:[#allocation2 + $0x70] sm:$0xff]
        %v219 = vld [vmem:[#allocation2 + $0x78] sm:$0xff]
        %v220 = vld [vmem:[#allocation2 + $0x80] sm:$0xff]
        %v221 = vld [vmem:[%s193 + $0x20] sm:$0x11]
        %s222 = scalar_lea.vmem [#allocation2], 136
        %v223 = vld [vmem:[%s222] sm:$0xff]
        %v224 = vld [vmem:[%s222 + $0x8] sm:$0xff]
        %v225 = vld [vmem:[%s222 + $0x10] sm:$0xff]
        %v226 = vld [vmem:[%s222 + $0x18] sm:$0xff]
        %v227 = vld [vmem:[%s222 + $0x20] sm:$0xff]
        %v228 = vld [vmem:[%s222 + $0x28] sm:$0xff]
        %v229 = vld [vmem:[%s222 + $0x30] sm:$0xff]
        %v230 = vld [vmem:[%s222 + $0x38] sm:$0xff]
        %v231 = vld [vmem:[%s222 + $0x40] sm:$0xff]
        %v232 = vld [vmem:[%s222 + $0x48] sm:$0xff]
        %v233 = vld [vmem:[%s222 + $0x50] sm:$0xff]
        %v234 = vld [vmem:[%s222 + $0x58] sm:$0xff]
        %v235 = vld [vmem:[%s222 + $0x60] sm:$0xff]
        %v236 = vld [vmem:[%s222 + $0x68] sm:$0xff]
        %v237 = vld [vmem:[%s222 + $0x70] sm:$0xff]
        %v238 = vld [vmem:[%s222 + $0x78] sm:$0xff]
        %v239 = vld [vmem:[%s222 + $0x80] sm:$0xff]
        %v245 = vunpack.c.l.b16 %v200
        %v246 = vunpack.c.h.b16 %v200
        %v247 = vunpack.c.l.b16 %v201
        %v248 = vunpack.c.h.b16 %v201
        %v249 = vunpack.c.l.b16 %v202
        %v250 = vunpack.c.h.b16 %v202
        %v251 = vunpack.c.l.b16 %v203
        %v252 = vunpack.c.h.b16 %v203
        %v253 = vunpack.c.l.b16 %v221
        %v254 = vunpack.c.h.b16 %v221
        %v255 = vpack.c.b16 %v247, %v245
        %v256 = vpack.c.b16 %v248, %v246
        %v257 = vpack.c.b16 %v251, %v249
        %v258 = vpack.c.b16 %v252, %v250
        %v259 = vpack.c.b16 %v253, %v253
        %v260 = vpack.c.b16 %v254, %v254
        %vm261 = vsmask.f32 7424
        %v263 = vshrl.u32 %v255, 16
        %v265 = vshll.u32 %v255, 16
        %v267 = vrot.slane %v265, 1
        %v268 = vor.u32 %v263, %v267
        %v270 = vshll.u32 %v257, 16
        %v272 = vrot.slane %v270, 1
        %v273 = vsel %vm261, %v268, %v272
        %v275 = vshrl.u32 %v256, 16
        %v277 = vshll.u32 %v256, 16
        %v279 = vrot.slane %v277, 1
        %v280 = vor.u32 %v275, %v279
        %v282 = vshll.u32 %v258, 16
        %v284 = vrot.slane %v282, 1
        %v285 = vsel %vm261, %v280, %v284
        %v286 = vshrl.u32 %v257, 16
        %v288 = vor.u32 %v286, %v272
        %v290 = vshll.u32 %v259, 16
        %v292 = vrot.slane %v290, 1
        %v293 = vsel %vm261, %v288, %v292
        %v294 = vshrl.u32 %v258, 16
        %v296 = vor.u32 %v294, %v284
        %v298 = vshll.u32 %v260, 16
        %v300 = vrot.slane %v298, 1
        %v301 = vsel %vm261, %v296, %v300
        %v321 = vunpack.c.l.b16 %v223
        %v322 = vunpack.c.h.b16 %v223
        %v323 = vunpack.c.l.b16 %v224
        %v324 = vunpack.c.h.b16 %v224
        %v325 = vunpack.c.l.b16 %v225
        %v326 = vunpack.c.h.b16 %v225
        %v327 = vunpack.c.l.b16 %v226
        %v328 = vunpack.c.h.b16 %v226
        %v329 = vunpack.c.l.b16 %v227
        %v330 = vunpack.c.h.b16 %v227
        %v331 = vunpack.c.l.b16 %v228
        %v332 = vunpack.c.h.b16 %v228
        %v333 = vunpack.c.l.b16 %v229
        %v334 = vunpack.c.h.b16 %v229
        %v335 = vunpack.c.l.b16 %v230
        %v336 = vunpack.c.h.b16 %v230
        %v337 = vunpack.c.l.b16 %v231
        %v338 = vunpack.c.h.b16 %v231
        %v339 = vunpack.c.l.b16 %v232
        %v340 = vunpack.c.h.b16 %v232
        %v341 = vunpack.c.l.b16 %v233
        %v342 = vunpack.c.h.b16 %v233
        %v343 = vunpack.c.l.b16 %v234
        %v344 = vunpack.c.h.b16 %v234
        %v345 = vunpack.c.l.b16 %v235
        %v346 = vunpack.c.h.b16 %v235
        %v347 = vunpack.c.l.b16 %v236
        %v348 = vunpack.c.h.b16 %v236
        %v349 = vunpack.c.l.b16 %v237
        %v350 = vunpack.c.h.b16 %v237
        %v351 = vunpack.c.l.b16 %v238
        %v352 = vunpack.c.h.b16 %v238
        %v353 = vunpack.c.l.b16 %v239
        %v354 = vunpack.c.h.b16 %v239
        %v355 = vpack.c.b16 %v323, %v321
        %v356 = vpack.c.b16 %v324, %v322
        %v357 = vpack.c.b16 %v327, %v325
        %v358 = vpack.c.b16 %v328, %v326
        %v359 = vpack.c.b16 %v331, %v329
        %v360 = vpack.c.b16 %v332, %v330
        %v361 = vpack.c.b16 %v335, %v333
        %v362 = vpack.c.b16 %v336, %v334
        %v363 = vpack.c.b16 %v339, %v337
        %v364 = vpack.c.b16 %v340, %v338
        %v365 = vpack.c.b16 %v343, %v341
        %v366 = vpack.c.b16 %v344, %v342
        %v367 = vpack.c.b16 %v347, %v345
        %v368 = vpack.c.b16 %v348, %v346
        %v369 = vpack.c.b16 %v351, %v349
        %v370 = vpack.c.b16 %v352, %v350
        %v371 = vpack.c.b16 %v353, %v353
        %v372 = vpack.c.b16 %v354, %v354
        %vm389 = vcmask 64512
        %v391 = vsel %vm389, %v285, 0
        %v394 = vsel %vm389, %v301, 0
        %vm396 = vcmask 1043456
        %v398 = vsel %vm396, %v371, 0
        %v401 = vsel %vm396, %v372, 0
        %403 = vmatprep.subr.bf16.mxu0 %v356
        %404 = vmatpush1.bf16.msra.mxu0 %v355
        %405 = vmatprep.subr.bf16.mxu0 %v358
        %406 = vmatpush1.bf16.msra.mxu0 %v357
        %407 = vmatprep.subr.bf16.mxu0 %v360
        %408 = vmatpush1.bf16.msra.mxu0 %v359
        %409 = vmatprep.subr.bf16.mxu0 %v362
        %410 = vmatpush1.bf16.msra.mxu0 %v361
        %411 = vmatprep.subr.bf16.mxu0 %v364
        %412 = vmatpush1.bf16.msra.mxu0 %v363
        %413 = vmatprep.subr.bf16.mxu0 %v366
        %414 = vmatpush1.bf16.msra.mxu0 %v365
        %415 = vmatprep.subr.bf16.mxu0 %v368
        %416 = vmatpush1.bf16.msra.mxu0 %v367
        %417 = vmatprep.subr.bf16.mxu0 %v370
        %418 = vmatpush1.bf16.msra.mxu0 %v369
        %419 = vmatprep.subr.bf16.mxu0 %v401
        %420 = vmatpush1.bf16.msra.mxu0 %v398
        %421 = vmatprep.subr.bf16.mxu0 0
        %422 = vmatpush1.bf16.msra.mxu0 0
        %423 = vmatprep.subr.bf16.mxu0 0
        %424 = vmatpush1.bf16.msra.mxu0 0
        %425 = vmatprep.subr.bf16.mxu0 0
        %426 = vmatpush1.bf16.msra.mxu0 0
        %427 = vmatprep.subr.bf16.mxu0 0
        %428 = vmatpush1.bf16.msra.mxu0 0
        %429 = vmatprep.subr.bf16.mxu0 0
        %430 = vmatpush1.bf16.msra.mxu0 0
        %431 = vmatprep.subr.bf16.mxu0 0
        %432 = vmatpush1.bf16.msra.mxu0 0
        %433 = vmatprep.subr.bf16.mxu0 0
        %434 = vmatpush1.bf16.msra.mxu0 0
        %435 = vmatprep.mubr.bf16.mxu0 %v391
        %436 = vmatmul.mubr.bf16.gmra.mrb[0].mxu0 %v273
        %v437 = vpop.f32.mrb[0].mxu0
        %v438 = vadd.f32 0.0, %v437
        %v439 = vpop.f32.mrb[0].mxu0
        %v440 = vadd.f32 0.0, %v439
        %v441 = vpop.f32.mrb[0].mxu0
        %v442 = vadd.f32 0.0, %v441
        %v443 = vpop.f32.mrb[0].mxu0
        %v444 = vadd.f32 0.0, %v443
        %445 = vmatprep.mubr.bf16.mxu0 %v394
        %446 = vmatmul.mubr.bf16.gmra.mrb[0].mxu0 %v293
        %v447 = vpop.f32.mrb[0].mxu0
        %v448 = vadd.f32 0.0, %v447
        %v449 = vpop.f32.mrb[0].mxu0
        %v450 = vadd.f32 0.0, %v449
        %v451 = vpop.f32.mrb[0].mxu0
        %v452 = vadd.f32 0.0, %v451
        %v453 = vpop.f32.mrb[0].mxu0
        %v454 = vadd.f32 0.0, %v453
        %455 = vdwg.mxu0
        %v475 = vunpack.c.l.b16 %v204
        %v476 = vunpack.c.h.b16 %v204
        %v477 = vunpack.c.l.b16 %v205
        %v478 = vunpack.c.h.b16 %v205
        %v479 = vunpack.c.l.b16 %v206
        %v480 = vunpack.c.h.b16 %v206
        %v481 = vunpack.c.l.b16 %v207
        %v482 = vunpack.c.h.b16 %v207
        %v483 = vunpack.c.l.b16 %v208
        %v484 = vunpack.c.h.b16 %v208
        %v485 = vunpack.c.l.b16 %v209
        %v486 = vunpack.c.h.b16 %v209
        %v487 = vunpack.c.l.b16 %v210
        %v488 = vunpack.c.h.b16 %v210
        %v489 = vunpack.c.l.b16 %v211
        %v490 = vunpack.c.h.b16 %v211
        %v491 = vunpack.c.l.b16 %v212
        %v492 = vunpack.c.h.b16 %v212
        %v493 = vunpack.c.l.b16 %v213
        %v494 = vunpack.c.h.b16 %v213
        %v495 = vunpack.c.l.b16 %v214
        %v496 = vunpack.c.h.b16 %v214
        %v497 = vunpack.c.l.b16 %v215
        %v498 = vunpack.c.h.b16 %v215
        %v499 = vunpack.c.l.b16 %v216
        %v500 = vunpack.c.h.b16 %v216
        %v501 = vunpack.c.l.b16 %v217
        %v502 = vunpack.c.h.b16 %v217
        %v503 = vunpack.c.l.b16 %v218
        %v504 = vunpack.c.h.b16 %v218
        %v505 = vunpack.c.l.b16 %v219
        %v506 = vunpack.c.h.b16 %v219
        %v507 = vunpack.c.l.b16 %v220
        %v508 = vunpack.c.h.b16 %v220
        %v509 = vpack.c.b16 %v477, %v475
        %v510 = vpack.c.b16 %v478, %v476
        %v511 = vpack.c.b16 %v481, %v479
        %v512 = vpack.c.b16 %v482, %v480
        %v513 = vpack.c.b16 %v485, %v483
        %v514 = vpack.c.b16 %v486, %v484
        %v515 = vpack.c.b16 %v489, %v487
        %v516 = vpack.c.b16 %v490, %v488
        %v517 = vpack.c.b16 %v493, %v491
        %v518 = vpack.c.b16 %v494, %v492
        %v519 = vpack.c.b16 %v497, %v495
        %v520 = vpack.c.b16 %v498, %v496
        %v521 = vpack.c.b16 %v501, %v499
        %v522 = vpack.c.b16 %v502, %v500
        %v523 = vpack.c.b16 %v505, %v503
        %v524 = vpack.c.b16 %v506, %v504
        %v525 = vpack.c.b16 %v507, %v507
        %v526 = vpack.c.b16 %v508, %v508
        %v543 = vsel %vm389, %v256, 0
        %v545 = vsel %vm389, %v258, 0
        %v548 = vsel %vm396, %v525, 0
        %v551 = vsel %vm396, %v526, 0
        %553 = vmatprep.subr.bf16.mxu0 %v510
        %554 = vmatpush1.bf16.msra.mxu0 %v509
        %555 = vmatprep.subr.bf16.mxu0 %v512
        %556 = vmatpush1.bf16.msra.mxu0 %v511
        %557 = vmatprep.subr.bf16.mxu0 %v514
        %558 = vmatpush1.bf16.msra.mxu0 %v513
        %559 = vmatprep.subr.bf16.mxu0 %v516
        %560 = vmatpush1.bf16.msra.mxu0 %v515
        %561 = vmatprep.subr.bf16.mxu0 %v518
        %562 = vmatpush1.bf16.msra.mxu0 %v517
        %563 = vmatprep.subr.bf16.mxu0 %v520
        %564 = vmatpush1.bf16.msra.mxu0 %v519
        %565 = vmatprep.subr.bf16.mxu0 %v522
        %566 = vmatpush1.bf16.msra.mxu0 %v521
        %567 = vmatprep.subr.bf16.mxu0 %v524
        %568 = vmatpush1.bf16.msra.mxu0 %v523
        %569 = vmatprep.subr.bf16.mxu0 %v551
        %570 = vmatpush1.bf16.msra.mxu0 %v548
        %571 = vmatprep.subr.bf16.mxu0 0
        %572 = vmatpush1.bf16.msra.mxu0 0
        %573 = vmatprep.subr.bf16.mxu0 0
        %574 = vmatpush1.bf16.msra.mxu0 0
        %575 = vmatprep.subr.bf16.mxu0 0
        %576 = vmatpush1.bf16.msra.mxu0 0
        %577 = vmatprep.subr.bf16.mxu0 0
        %578 = vmatpush1.bf16.msra.mxu0 0
        %579 = vmatprep.subr.bf16.mxu0 0
        %580 = vmatpush1.bf16.msra.mxu0 0
        %581 = vmatprep.subr.bf16.mxu0 0
        %582 = vmatpush1.bf16.msra.mxu0 0
        %583 = vmatprep.subr.bf16.mxu0 0
        %584 = vmatpush1.bf16.msra.mxu0 0
        %585 = vmatprep.mubr.bf16.mxu0 %v543
        %586 = vmatmul.mubr.bf16.gmra.mrb[0].mxu0 %v255
        %v587 = vpop.f32.mrb[0].mxu0
        %v588 = vadd.f32 %v438, %v587
        %v589 = vpop.f32.mrb[0].mxu0
        %v590 = vadd.f32 %v440, %v589
        %v591 = vpop.f32.mrb[0].mxu0
        %v592 = vadd.f32 %v442, %v591
        %v593 = vpop.f32.mrb[0].mxu0
        %v594 = vadd.f32 %v444, %v593
        %595 = vmatprep.mubr.bf16.mxu0 %v545
        %596 = vmatmul.mubr.bf16.gmra.mrb[0].mxu0 %v257
        %v597 = vpop.f32.mrb[0].mxu0
        %v598 = vadd.f32 %v448, %v597
        %v599 = vpop.f32.mrb[0].mxu0
        %v600 = vadd.f32 %v450, %v599
        %v601 = vpop.f32.mrb[0].mxu0
        %v602 = vadd.f32 %v452, %v601
        %v603 = vpop.f32.mrb[0].mxu0
        %v604 = vadd.f32 %v454, %v603
        %605 = vdwg.mxu0
        %v606 = vld [vmem:[%s193] sm:$0xee]
        %s607 = scalar_lea.vmem [#allocation2], 272
        %v608 = vld [vmem:[%s607] sm:$0xff]
        %v609 = vld [vmem:[%s607 + $0x8] sm:$0xff]
        %v610 = vld [vmem:[%s607 + $0x10] sm:$0xff]
        %v611 = vld [vmem:[%s607 + $0x18] sm:$0xff]
        %v612 = vld [vmem:[%s607 + $0x20] sm:$0xff]
        %v613 = vld [vmem:[%s607 + $0x28] sm:$0xff]
        %v614 = vld [vmem:[%s607 + $0x30] sm:$0xff]
        %v615 = vld [vmem:[%s607 + $0x38] sm:$0xff]
        %v616 = vld [vmem:[%s607 + $0x40] sm:$0xff]
        %v617 = vld [vmem:[%s607 + $0x48] sm:$0xff]
        %v618 = vld [vmem:[%s607 + $0x50] sm:$0xff]
        %v619 = vld [vmem:[%s607 + $0x58] sm:$0xff]
        %v620 = vld [vmem:[%s607 + $0x60] sm:$0xff]
        %v621 = vld [vmem:[%s607 + $0x68] sm:$0xff]
        %v622 = vld [vmem:[%s607 + $0x70] sm:$0xff]
        %v623 = vld [vmem:[%s607 + $0x78] sm:$0xff]
        %v624 = vld [vmem:[%s607 + $0x80] sm:$0xff]
        %v626 = vunpack.c.l.b16 %v606
        %v627 = vunpack.c.h.b16 %v606
        %v628 = vpack.c.b16 %v247, %v626
        %v629 = vpack.c.b16 %v248, %v627
        %vm630 = vcmask 1046528
        %v631 = vrot.slane %v628, 1
        %v632 = vrot.slane %v257, 1
        %v633 = vsel %vm630, %v631, %v632
        %v634 = vrot.slane %v629, 1
        %v635 = vrot.slane %v258, 1
        %v636 = vsel %vm630, %v634, %v635
        %v637 = vrot.slane %v259, 1
        %v638 = vsel %vm630, %v632, %v637
        %v639 = vrot.slane %v260, 1
        %v640 = vsel %vm630, %v635, %v639
        %v660 = vunpack.c.l.b16 %v608
        %v661 = vunpack.c.h.b16 %v608
        %v662 = vunpack.c.l.b16 %v609
        %v663 = vunpack.c.h.b16 %v609
        %v664 = vunpack.c.l.b16 %v610
        %v665 = vunpack.c.h.b16 %v610
        %v666 = vunpack.c.l.b16 %v611
        %v667 = vunpack.c.h.b16 %v611
        %v668 = vunpack.c.l.b16 %v612
        %v669 = vunpack.c.h.b16 %v612
        %v670 = vunpack.c.l.b16 %v613
        %v671 = vunpack.c.h.b16 %v613
        %v672 = vunpack.c.l.b16 %v614
        %v673 = vunpack.c.h.b16 %v614
        %v674 = vunpack.c.l.b16 %v615
        %v675 = vunpack.c.h.b16 %v615
        %v676 = vunpack.c.l.b16 %v616
        %v677 = vunpack.c.h.b16 %v616
        %v678 = vunpack.c.l.b16 %v617
        %v679 = vunpack.c.h.b16 %v617
        %v680 = vunpack.c.l.b16 %v618
        %v681 = vunpack.c.h.b16 %v618
        %v682 = vunpack.c.l.b16 %v619
        %v683 = vunpack.c.h.b16 %v619
        %v684 = vunpack.c.l.b16 %v620
        %v685 = vunpack.c.h.b16 %v620
        %v686 = vunpack.c.l.b16 %v621
        %v687 = vunpack.c.h.b16 %v621
        %v688 = vunpack.c.l.b16 %v622
        %v689 = vunpack.c.h.b16 %v622
        %v690 = vunpack.c.l.b16 %v623
        %v691 = vunpack.c.h.b16 %v623
        %v692 = vunpack.c.l.b16 %v624
        %v693 = vunpack.c.h.b16 %v624
        %v694 = vpack.c.b16 %v662, %v660
        %v695 = vpack.c.b16 %v663, %v661
        %v696 = vpack.c.b16 %v666, %v664
        %v697 = vpack.c.b16 %v667, %v665
        %v698 = vpack.c.b16 %v670, %v668
        %v699 = vpack.c.b16 %v671, %v669
        %v700 = vpack.c.b16 %v674, %v672
        %v701 = vpack.c.b16 %v675, %v673
        %v702 = vpack.c.b16 %v678, %v676
        %v703 = vpack.c.b16 %v679, %v677
        %v704 = vpack.c.b16 %v682, %v680
        %v705 = vpack.c.b16 %v683, %v681
        %v706 = vpack.c.b16 %v686, %v684
        %v707 = vpack.c.b16 %v687, %v685
        %v708 = vpack.c.b16 %v690, %v688
        %v709 = vpack.c.b16 %v691, %v689
        %v710 = vpack.c.b16 %v692, %v692
        %v711 = vpack.c.b16 %v693, %v693
        %v729 = vsel %vm389, %v636, 0
        %v732 = vsel %vm389, %v640, 0
        %v735 = vsel %vm396, %v710, 0
        %v738 = vsel %vm396, %v711, 0
        %740 = vmatprep.subr.bf16.mxu0 %v695
        %741 = vmatpush1.bf16.msra.mxu0 %v694
        %742 = vmatprep.subr.bf16.mxu0 %v697
        %743 = vmatpush1.bf16.msra.mxu0 %v696
        %744 = vmatprep.subr.bf16.mxu0 %v699
        %745 = vmatpush1.bf16.msra.mxu0 %v698
        %746 = vmatprep.subr.bf16.mxu0 %v701
        %747 = vmatpush1.bf16.msra.mxu0 %v700
        %748 = vmatprep.subr.bf16.mxu0 %v703
        %749 = vmatpush1.bf16.msra.mxu0 %v702
        %750 = vmatprep.subr.bf16.mxu0 %v705
        %751 = vmatpush1.bf16.msra.mxu0 %v704
        %752 = vmatprep.subr.bf16.mxu0 %v707
        %753 = vmatpush1.bf16.msra.mxu0 %v706
        %754 = vmatprep.subr.bf16.mxu0 %v709
        %755 = vmatpush1.bf16.msra.mxu0 %v708
        %756 = vmatprep.subr.bf16.mxu0 %v738
        %757 = vmatpush1.bf16.msra.mxu0 %v735
        %758 = vmatprep.subr.bf16.mxu0 0
        %759 = vmatpush1.bf16.msra.mxu0 0
        %760 = vmatprep.subr.bf16.mxu0 0
        %761 = vmatpush1.bf16.msra.mxu0 0
        %762 = vmatprep.subr.bf16.mxu0 0
        %763 = vmatpush1.bf16.msra.mxu0 0
        %764 = vmatprep.subr.bf16.mxu0 0
        %765 = vmatpush1.bf16.msra.mxu0 0
        %766 = vmatprep.subr.bf16.mxu0 0
        %767 = vmatpush1.bf16.msra.mxu0 0
        %768 = vmatprep.subr.bf16.mxu0 0
        %769 = vmatpush1.bf16.msra.mxu0 0
        %770 = vmatprep.subr.bf16.mxu0 0
        %771 = vmatpush1.bf16.msra.mxu0 0
        %772 = vmatprep.mubr.bf16.mxu0 %v729
        %773 = vmatmul.mubr.bf16.gmra.mrb[0].mxu0 %v633
        %v774 = vpop.f32.mrb[0].mxu0
        %v775 = vadd.f32 0.0, %v774
        %v776 = vpop.f32.mrb[0].mxu0
        %v777 = vadd.f32 0.0, %v776
        %v778 = vpop.f32.mrb[0].mxu0
        %v779 = vadd.f32 0.0, %v778
        %v780 = vpop.f32.mrb[0].mxu0
        %v781 = vadd.f32 0.0, %v780
        %782 = vmatprep.mubr.bf16.mxu0 %v732
        %783 = vmatmul.mubr.bf16.gmra.mrb[0].mxu0 %v638
        %v784 = vpop.f32.mrb[0].mxu0
        %v785 = vadd.f32 0.0, %v784
        %v786 = vpop.f32.mrb[0].mxu0
        %v787 = vadd.f32 0.0, %v786
        %v788 = vpop.f32.mrb[0].mxu0
        %v789 = vadd.f32 0.0, %v788
        %v790 = vpop.f32.mrb[0].mxu0
        %v791 = vadd.f32 0.0, %v790
        %792 = vdwg.mxu0
        %v793 = vadd.f32 %v588, %v775
        %v794 = vadd.f32 %v590, %v777
        %v795 = vadd.f32 %v592, %v779
        %v796 = vadd.f32 %v594, %v781
        %v797 = vadd.f32 %v598, %v785
        %v798 = vadd.f32 %v600, %v787
        %v799 = vadd.f32 %v602, %v789
        %v800 = vadd.f32 %v604, %v791
        %v801 = vld [vmem:[#allocation4] sm:$0x3]
        %v803 = vlaneseq
        %v804 = vshrl.u32 %v803, 7
        %v805 = vsub.s32 0, %v804
        %v806 = vrot.slane %v801, %v805
        %v807 = vlaneseq
        %v808 = vshrl.u32 %v807, 7
        %v809 = vsub.s32 1, %v808
        %v810 = vrot.slane %v801, %v809
        %v813 = vadd.f32 %v793, %v806
        %v814 = vadd.f32 %v794, %v810
        %v815 = vadd.f32 %v795, %v806
        %v816 = vadd.f32 %v796, %v810
        %v817 = vadd.f32 %v797, %v806
        %v818 = vadd.f32 %v798, %v810
        %v819 = vadd.f32 %v799, %v806
        %v820 = vadd.f32 %v800, %v810
        %v821 = vmax.f32 %v813, 0.0
        %v822 = vmax.f32 %v814, 0.0
        %v823 = vmax.f32 %v815, 0.0
        %v824 = vmax.f32 %v816, 0.0
        %v825 = vmax.f32 %v817, 0.0
        %v826 = vmax.f32 %v818, 0.0
        %v827 = vmax.f32 %v819, 0.0
        %v828 = vmax.f32 %v820, 0.0
        %829 = vst [vmem:[%s198] sm:$0xff] %v821
        %830 = vst [vmem:[%s198 + $0x8] sm:$0xff] %v822
        %831 = vst [vmem:[%s198 + $0x10] sm:$0xff] %v823
        %832 = vst [vmem:[%s198 + $0x18] sm:$0xff] %v824
        %833 = vst [vmem:[%s198 + $0x20] sm:$0xff] %v825
        %834 = vst [vmem:[%s198 + $0x28] sm:$0xff] %v826
        %835 = vst [vmem:[%s198 + $0x30] sm:$0xff] %v827
        %836 = vst [vmem:[%s198 + $0x38] sm:$0xff] %v828
        %p837 = scmp.lt.s32.totalorder %s16, 1
        %s838 = scalar_select %p837, %s16, 1
        %s839 = smul.addr %s838, 8
        %s840 = smul.addr %s839, 8
        %s841 = scalar_lea.vmem %s3, %s840
        // Predicated region
        $region41: #{duc_nx_forward.3} parent=31 // pred_check
          %p842 = pneg %p102
        $region42: #{duc_nx_forward.3} parent=31 // pred_check_branch
          %844 = sbr.rel (%p842) target = $region44
        $region43: #{duc_nx_forward.3} parent=31 // pred_region
          _
        $region44: #{duc_nx_forward.3} parent=31 // pred_fallthru
          _
      $region32: #{duc_nx_forward.3} parent=5 // pred_fallthru
        _
      %p845 = scmp.le.s32.totalorder 2, %s11
      // Predicated region
      $region45: #{duc_nx_forward.3} parent=5 // pred_check
        %p846 = pneg %p845
      $region46: #{duc_nx_forward.3} parent=5 // pred_check_branch
        %848 = sbr.rel (%p846) target = $region48
      $region47: #{duc_nx_forward.3} parent=5 // pred_region
        %s849 = ssub.s32 %s11, 2
        // Predicated region
        $region49: #{duc_nx_forward.3} parent=47 // pred_check
          %p850 = pneg %p108
        $region50: #{duc_nx_forward.3} parent=47 // pred_check_branch
          %852 = sbr.rel (%p850) target = $region52
        $region51: #{duc_nx_forward.3} parent=47 // pred_region
          %p853 = scmp.lt.s32.totalorder %s17, 1
          %s854 = scalar_select %p853, %s17, 1
          %s855 = smul.addr %s854, 8
          %s856 = smul.addr %s855, 8
          %s857 = scalar_lea.vmem %s3, %s856
        $region52: #{duc_nx_forward.3} parent=47 // pred_fallthru
          _
      $region48: #{duc_nx_forward.3} parent=5 // pred_fallthru
        _
    $region6: #{duc_nx_forward.3} parent=1 // loop_footer
      %s15 = sadd.s32 1, %s11
    $region7: #{duc_nx_forward.3} parent=1 // loop_footer_branch
      %10 = sbr.rel target = $region3
    $region8: #{duc_nx_forward.3} parent=1 // loop_exit
      _
    %858 = vsyncpa [#allocation3], 1
    %s859 = scalar_lea.sflag [#allocation3], 1
    %860 = vsyncpa %s859, 1
    %861 = vsyncpa [#allocation5], 1

</llo_original>
